<compile_context>
chip_gen: v6e
topology: v6e:2x2x1
jax: 0.10.0
libtpu: 0.0.40
codegen_flags: <defaults>
</compile_context>

<pallas_src>
import math

import jax
import jax.numpy as jnp
from jax.experimental import pallas as pl
from jax.experimental.pallas import tpu as pltpu

NEG_SLOPE = 0.01   # F.leaky_relu default negative_slope
HIDDEN = 128       # hidden widths 50 / 100 / 25 all fit one 128-lane width
_PREC = jax.lax.Precision.HIGHEST


def _round_up(v, m):
    return (v + m - 1) // m * m


def _leaky(v):
    return jnp.where(v > 0, v, NEG_SLOPE * v)


def mlp_kernel(x_ref, w1_ref, w23_ref, w4_ref, b123_ref, b4_ref, o_ref):
    """Whole 4-layer MLP forward for one (tile_b, in_size) batch tile."""
    x = x_ref[...]                     # already float32 (cast once in wrapper)
    b123 = b123_ref[...]               # (3, HIDDEN) padded biases for fc1..fc3

    h = _leaky(jnp.dot(x, w1_ref[...],
                       preferred_element_type=jnp.float32, precision=_PREC)
               + b123[0:1, :])
    h = _leaky(jnp.dot(h, w23_ref[0, :, :],
                       preferred_element_type=jnp.float32, precision=_PREC)
               + b123[1:2, :])
    # nn.Dropout(0.25): identity in eval mode.
    # TODO(synk): training-mode dropout would need pltpu.prng_seed/prng_random_bits.
    h = _leaky(jnp.dot(h, w23_ref[1, :, :],
                       preferred_element_type=jnp.float32, precision=_PREC)
               + b123[2:3, :])
    h = _leaky(jnp.dot(h, w4_ref[...],
                       preferred_element_type=jnp.float32, precision=_PREC)
               + b4_ref[...])

    o_ref[...] = h.astype(o_ref.dtype)


def _pack_params(params, in_size, out_size):
    """Zero-pad hidden dims (only) to 128 lanes and stack into resident slabs.

    The contraction dim of w1 (in_size) and the output dim of w4/b4 (out_size)
    are intentionally left UNpadded to keep HBM traffic minimal.
    Zero columns in w1/w2/w3 + zero bias lanes keep padded hidden lanes exactly 0
    through every leaky_relu, so padded rows of w2/w3/w4 contribute nothing.
    """
    def pad2(a, rows, cols):
        a = a.astype(jnp.float32)
        return jnp.pad(a, ((0, rows - a.shape[0]), (0, cols - a.shape[1])))

    w1 = pad2(params["w1"], in_size, HIDDEN)                     # (in_size, 128)
    w23 = jnp.stack([pad2(params["w2"], HIDDEN, HIDDEN),
                     pad2(params["w3"], HIDDEN, HIDDEN)])        # (2, 128, 128)
    w4 = pad2(params["w4"], HIDDEN, out_size)                    # (128, out_size)
    b123 = jnp.concatenate(
        [pad2(params[f"b{i}"], 1, HIDDEN) for i in (1, 2, 3)], axis=0)  # (3, 128)
    b4 = params["b4"].astype(jnp.float32)                        # (1, out_size)
    return w1, w23, w4, b123, b4


def _num_tensorcores():
    """2 for megacore chips (v4 / v5p / v7x), else 1 (v5e / v6e)."""
    try:
        kind = jax.devices()[0].device_kind.lower().replace(" ", "")
    except Exception:
        return 1
    if any(tag in kind for tag in ("v7", "7x", "v4", "v5p")):
        return 2
    return 1


def _default_tile_b(B):
    cap = 1024
    if _num_tensorcores() >= 2 and B >= 2 * 512:
        # Split only when each TensorCore gets a >=512-row tile.
        return min(cap, _round_up(pl.cdiv(B, 2), 8))
    # Single TC (or small batch): one big step; serial splits only add overhead.
    return min(cap, _round_up(B, 8))


def _full_spec(a):
    nd = a.ndim
    return pl.BlockSpec(a.shape, lambda i: (0,) * nd)


def xarxa_neuronal_forward(x, params, *, tile_b=None):
    """4-layer MLP forward (eval-mode dropout). x: (B, in_size) -> (B, out_size) f32.

    params: w1..w4 stored transposed as (in_features, out_features), b1..b4 as (1, out).
    """
    B, in_size = x.shape
    out_size = params["w4"].shape[1]

    if tile_b is None:
        tile_b = _default_tile_b(B)
    tile_b = max(8, _round_up(tile_b, 8))

    # x.float() semantics of the PyTorch module: cast once here (no-op if already f32).
    x = x.astype(jnp.float32)
    w1, w23, w4, b123, b4 = _pack_params(params, in_size, out_size)

    grid = (pl.cdiv(B, tile_b),)   # ragged last block handled by Pallas (masked writes)

    out = pl.pallas_call(
        mlp_kernel,
        out_shape=jax.ShapeDtypeStruct((B, out_size), jnp.float32),
        grid=grid,
        in_specs=[
            pl.BlockSpec((tile_b, in_size), lambda i: (i, 0)),   # batch tile of x
            _full_spec(w1), _full_spec(w23), _full_spec(w4),
            _full_spec(b123), _full_spec(b4),
        ],
        out_specs=pl.BlockSpec((tile_b, out_size), lambda i: (i, 0)),
        compiler_params=pltpu.CompilerParams(
            dimension_semantics=("parallel",)),
    )(x, w1, w23, w4, b123, b4)

    return out


def init_params(key, in_size, out_size):
    """nn.Linear-style init: U[-1/sqrt(fan_in), 1/sqrt(fan_in)].

    Weights stored transposed, i.e. (in_features, out_features); biases (1, out)."""
    dims = [(in_size, 50), (50, 100), (100, 25), (25, out_size)]
    params = {}
    for idx, (fi, fo) in enumerate(dims, start=1):
        key, kw, kb = jax.random.split(key, 3)
        bound = 1.0 / math.sqrt(fi)
        params[f"w{idx}"] = jax.random.uniform(
            kw, (fi, fo), jnp.float32, minval=-bound, maxval=bound)
        params[f"b{idx}"] = jax.random.uniform(
            kb, (1, fo), jnp.float32, minval=-bound, maxval=bound)
    return params


def reference_forward(x, params):
    """Pure-JAX reference of the PyTorch forward (dropout in eval mode)."""
    h = x.astype(jnp.float32)
    for i in range(1, 5):
        h = _leaky(jnp.dot(h, params[f"w{i}"], precision=_PREC) + params[f"b{i}"])
    return h


if __name__ == "__main__":
    key = jax.random.PRNGKey(0)
    in_size, out_size = 32, 10

    kx, kx2, kp = jax.random.split(key, 3)
    params = init_params(kp, in_size, out_size)

    # Case 1: batch = 16 -> single grid step on 1-TC chips, lane-/row-exact I/O.
    x = jax.random.normal(kx, (16, in_size), dtype=jnp.float32)
    out = jax.block_until_ready(xarxa_neuronal_forward(x, params))
    ref = reference_forward(x, params)
    assert out.shape == (16, out_size)
    assert jnp.allclose(out, ref, atol=1e-4, rtol=1e-4), "mismatch vs JAX reference (B=16)"

    # Case 2: batch = 5 (not a multiple of 8) -> exercises ragged (masked) last block.
    x2 = jax.random.normal(kx2, (5, in_size), dtype=jnp.float32)
    out2 = jax.block_until_ready(xarxa_neuronal_forward(x2, params))
    ref2 = reference_forward(x2, params)
    assert out2.shape == (5, out_size)
    assert jnp.allclose(out2, ref2, atol=1e-4, rtol=1e-4), "mismatch vs JAX reference (B=5)"

    print("KERNEL_OK")
</pallas_src>

<mosaic_0001>
module attributes {stable_mosaic.version = 11 : i64} {
  func.func @mlp_kernel(%arg0: i32, %arg1: memref<16x32xf32, #tpu.memory_space<vmem>>, %arg2: memref<32x128xf32, #tpu.memory_space<vmem>>, %arg3: memref<2x128x128xf32, #tpu.memory_space<vmem>>, %arg4: memref<128x10xf32, #tpu.memory_space<vmem>>, %arg5: memref<3x128xf32, #tpu.memory_space<vmem>>, %arg6: memref<1x10xf32, #tpu.memory_space<vmem>>, %arg7: memref<16x10xf32, #tpu.memory_space<vmem>>) attributes {dimension_semantics = [#tpu.dimension_semantics<parallel>], iteration_bounds = array<i64: 1>, scalar_prefetch = 0 : i64, scratch_operands = 0 : i64, tpu.core_type = #tpu.core_type<tc>, window_params = [{transform_indices = @transform_0, window_bounds = array<i64: 16, 32>}, {pipeline_mode = #tpu.pipeline_mode<synchronous>, transform_indices = @transform_1, window_bounds = array<i64: 32, 128>}, {pipeline_mode = #tpu.pipeline_mode<synchronous>, transform_indices = @transform_2, window_bounds = array<i64: 2, 128, 128>}, {pipeline_mode = #tpu.pipeline_mode<synchronous>, transform_indices = @transform_3, window_bounds = array<i64: 128, 10>}, {pipeline_mode = #tpu.pipeline_mode<synchronous>, transform_indices = @transform_4, window_bounds = array<i64: 3, 128>}, {pipeline_mode = #tpu.pipeline_mode<synchronous>, transform_indices = @transform_5, window_bounds = array<i64: 1, 10>}, {transform_indices = @transform_6, window_bounds = array<i64: 16, 10>}]} {
    %c0 = arith.constant 0 : index
    %c0_0 = arith.constant 0 : index
    %0 = vector.load %arg1[%c0, %c0_0] : memref<16x32xf32, #tpu.memory_space<vmem>>, vector<16x32xf32>
    %c0_1 = arith.constant 0 : index
    %c0_2 = arith.constant 0 : index
    %1 = vector.load %arg5[%c0_1, %c0_2] : memref<3x128xf32, #tpu.memory_space<vmem>>, vector<3x128xf32>
    %c0_3 = arith.constant 0 : index
    %c0_4 = arith.constant 0 : index
    %2 = vector.load %arg2[%c0_3, %c0_4] : memref<32x128xf32, #tpu.memory_space<vmem>>, vector<32x128xf32>
    %cst = arith.constant dense<0.000000e+00> : vector<16x128xf32>
    %3 = tpu.matmul %0, %2, %cst {dimension_numbers = #tpu.dot_dimension_numbers<[1], [0], [0], [1], [0, 0, 1, 1], [], []>, precision = #tpu.contract_precision<fp32>} : vector<16x32xf32>, vector<32x128xf32>, vector<16x128xf32> -> vector<16x128xf32>
    %4 = vector.extract_strided_slice %1 {offsets = [0, 0], sizes = [1, 128], strides = [1, 1]} : vector<3x128xf32> to vector<1x128xf32>
    %5 = vector.broadcast %4 : vector<1x128xf32> to vector<16x128xf32>
    %6 = arith.addf %3, %5 : vector<16x128xf32>
    %cst_5 = arith.constant 0.000000e+00 : f32
    %7 = vector.broadcast %cst_5 : f32 to vector<16x128xf32>
    %8 = arith.cmpf ogt, %6, %7 : vector<16x128xf32>
    %cst_6 = arith.constant 0.00999999977 : f32
    %9 = vector.broadcast %cst_6 : f32 to vector<16x128xf32>
    %10 = arith.mulf %9, %6 : vector<16x128xf32>
    %11 = arith.select %8, %6, %10 : vector<16x128xi1>, vector<16x128xf32>
    %c0_7 = arith.constant 0 : index
    %c0_8 = arith.constant 0 : index
    %c0_9 = arith.constant 0 : index
    %12 = vector.load %arg3[%c0_7, %c0_8, %c0_9] : memref<2x128x128xf32, #tpu.memory_space<vmem>>, vector<1x128x128xf32>
    %13 = vector.shape_cast %12 : vector<1x128x128xf32> to vector<128x128xf32>
    %cst_10 = arith.constant dense<0.000000e+00> : vector<16x128xf32>
    %14 = tpu.matmul %11, %13, %cst_10 {dimension_numbers = #tpu.dot_dimension_numbers<[1], [0], [0], [1], [0, 0, 1, 1], [], []>, precision = #tpu.contract_precision<fp32>} : vector<16x128xf32>, vector<128x128xf32>, vector<16x128xf32> -> vector<16x128xf32>
    %15 = vector.extract_strided_slice %1 {offsets = [1, 0], sizes = [1, 128], strides = [1, 1]} : vector<3x128xf32> to vector<1x128xf32>
    %16 = vector.broadcast %15 : vector<1x128xf32> to vector<16x128xf32>
    %17 = arith.addf %14, %16 : vector<16x128xf32>
    %cst_11 = arith.constant 0.000000e+00 : f32
    %18 = vector.broadcast %cst_11 : f32 to vector<16x128xf32>
    %19 = arith.cmpf ogt, %17, %18 : vector<16x128xf32>
    %cst_12 = arith.constant 0.00999999977 : f32
    %20 = vector.broadcast %cst_12 : f32 to vector<16x128xf32>
    %21 = arith.mulf %20, %17 : vector<16x128xf32>
    %22 = arith.select %19, %17, %21 : vector<16x128xi1>, vector<16x128xf32>
    %c1 = arith.constant 1 : index
    %c0_13 = arith.constant 0 : index
    %c0_14 = arith.constant 0 : index
    %23 = vector.load %arg3[%c1, %c0_13, %c0_14] : memref<2x128x128xf32, #tpu.memory_space<vmem>>, vector<1x128x128xf32>
    %24 = vector.shape_cast %23 : vector<1x128x128xf32> to vector<128x128xf32>
    %cst_15 = arith.constant dense<0.000000e+00> : vector<16x128xf32>
    %25 = tpu.matmul %22, %24, %cst_15 {dimension_numbers = #tpu.dot_dimension_numbers<[1], [0], [0], [1], [0, 0, 1, 1], [], []>, precision = #tpu.contract_precision<fp32>} : vector<16x128xf32>, vector<128x128xf32>, vector<16x128xf32> -> vector<16x128xf32>
    %26 = vector.extract_strided_slice %1 {offsets = [2, 0], sizes = [1, 128], strides = [1, 1]} : vector<3x128xf32> to vector<1x128xf32>
    %27 = vector.broadcast %26 : vector<1x128xf32> to vector<16x128xf32>
    %28 = arith.addf %25, %27 : vector<16x128xf32>
    %cst_16 = arith.constant 0.000000e+00 : f32
    %29 = vector.broadcast %cst_16 : f32 to vector<16x128xf32>
    %30 = arith.cmpf ogt, %28, %29 : vector<16x128xf32>
    %cst_17 = arith.constant 0.00999999977 : f32
    %31 = vector.broadcast %cst_17 : f32 to vector<16x128xf32>
    %32 = arith.mulf %31, %28 : vector<16x128xf32>
    %33 = arith.select %30, %28, %32 : vector<16x128xi1>, vector<16x128xf32>
    %c0_18 = arith.constant 0 : index
    %c0_19 = arith.constant 0 : index
    %34 = vector.load %arg4[%c0_18, %c0_19] : memref<128x10xf32, #tpu.memory_space<vmem>>, vector<128x10xf32>
    %cst_20 = arith.constant dense<0.000000e+00> : vector<16x10xf32>
    %35 = tpu.matmul %33, %34, %cst_20 {dimension_numbers = #tpu.dot_dimension_numbers<[1], [0], [0], [1], [0, 0, 1, 1], [], []>, precision = #tpu.contract_precision<fp32>} : vector<16x128xf32>, vector<128x10xf32>, vector<16x10xf32> -> vector<16x10xf32>
    %c0_21 = arith.constant 0 : index
    %c0_22 = arith.constant 0 : index
    %36 = vector.load %arg6[%c0_21, %c0_22] : memref<1x10xf32, #tpu.memory_space<vmem>>, vector<1x10xf32>
    %37 = vector.broadcast %36 : vector<1x10xf32> to vector<16x10xf32>
    %38 = arith.addf %35, %37 : vector<16x10xf32>
    %cst_23 = arith.constant 0.000000e+00 : f32
    %39 = vector.broadcast %cst_23 : f32 to vector<16x10xf32>
    %40 = arith.cmpf ogt, %38, %39 : vector<16x10xf32>
    %cst_24 = arith.constant 0.00999999977 : f32
    %41 = vector.broadcast %cst_24 : f32 to vector<16x10xf32>
    %42 = arith.mulf %41, %38 : vector<16x10xf32>
    %43 = arith.select %40, %38, %42 : vector<16x10xi1>, vector<16x10xf32>
    %c0_25 = arith.constant 0 : index
    %c0_26 = arith.constant 0 : index
    %44 = vector.load %arg7[%c0_25, %c0_26] : memref<16x10xf32, #tpu.memory_space<vmem>>, vector<16x10xf32>
    tpu.vector_store %arg7[%c0_25, %c0_26], %43 {strides = array<i32>} : memref<16x10xf32, #tpu.memory_space<vmem>>, vector<16x10xf32>,
    return
  }
  func.func @transform_0(%arg0: i32) -> (i32, i32) {
    %c0_i32 = arith.constant 0 : i32
    %c0_i32_0 = arith.constant 0 : i32
    return %arg0, %c0_i32 : i32, i32
  }
  func.func @transform_1(%arg0: i32) -> (i32, i32) {
    %c0_i32 = arith.constant 0 : i32
    %c0_i32_0 = arith.constant 0 : i32
    %c0_i32_1 = arith.constant 0 : i32
    return %c0_i32, %c0_i32_0 : i32, i32
  }
  func.func @transform_2(%arg0: i32) -> (i32, i32, i32) {
    %c0_i32 = arith.constant 0 : i32
    %c0_i32_0 = arith.constant 0 : i32
    %c0_i32_1 = arith.constant 0 : i32
    %c0_i32_2 = arith.constant 0 : i32
    return %c0_i32, %c0_i32_0, %c0_i32_1 : i32, i32, i32
  }
  func.func @transform_3(%arg0: i32) -> (i32, i32) {
    %c0_i32 = arith.constant 0 : i32
    %c0_i32_0 = arith.constant 0 : i32
    %c0_i32_1 = arith.constant 0 : i32
    return %c0_i32, %c0_i32_0 : i32, i32
  }
  func.func @transform_4(%arg0: i32) -> (i32, i32) {
    %c0_i32 = arith.constant 0 : i32
    %c0_i32_0 = arith.constant 0 : i32
    %c0_i32_1 = arith.constant 0 : i32
    return %c0_i32, %c0_i32_0 : i32, i32
  }
  func.func @transform_5(%arg0: i32) -> (i32, i32) {
    %c0_i32 = arith.constant 0 : i32
    %c0_i32_0 = arith.constant 0 : i32
    %c0_i32_1 = arith.constant 0 : i32
    return %c0_i32, %c0_i32_0 : i32, i32
  }
  func.func @transform_6(%arg0: i32) -> (i32, i32) {
    %c0_i32 = arith.constant 0 : i32
    %c0_i32_0 = arith.constant 0 : i32
    return %arg0, %c0_i32 : i32, i32
  }
}

</mosaic_0001>

<llo_original>
// kernel: tpu_custom_call.1
$region0: #{tpu_custom_call.1}
  #allocation0 [shape = 'u32[]', space=smem, size = 0x4, offset = 0x4, fixed_abs, tag = 'smem constant byte address 0x4 - core index']
  #allocation1 [shape = 'u32[144,128]{1,0:T(1,128)}', space=vmem, size = 0x12000, scoped, tag = 'internal scratch']
  %s0 = inlined_call_operand.vmem [shape: f32[16,32], index: 0, kind: input, shape index: {}]
  %s1 = inlined_call_operand.vmem [shape: f32[32,128], index: 1, kind: input, shape index: {}]
  %s2 = inlined_call_operand.hbm [shape: f32[2,128,128], index: 2, kind: input, shape index: {}]
  %s3 = inlined_call_operand.vmem [shape: f32[128,10], index: 3, kind: input, shape index: {}]
  %s4 = inlined_call_operand.vmem [shape: f32[3,128], index: 4, kind: input, shape index: {}]
  %s5 = inlined_call_operand.vmem [shape: f32[1,10], index: 5, kind: input, shape index: {}]
  %s6 = inlined_call_operand.hbm [shape: f32[16,10], index: 6, kind: output, shape index: {}]
  %s7 = sld [smem:[#allocation0]]
  $region38: #{tpu_custom_call.1} parent=0
    _
  %s9 = ssub.s32 1, %s7
  %s10 = scalar_select 0, %s9, %s7
  $region1: #{tpu_custom_call.1} parent=0
    #allocation2 [shape = 'u8[131072]{0}', space=vmem, size = 0x20000, scoped, tag = 'input window, operand 2, single buffered']
    #allocation3 [shape = 's32[1]{0}', space=sflag, size = 0x4, scoped, tag = 'scoped memory for tpu_custom_call.1']
    #allocation4 [shape = 's32[1]{0}', space=sflag, size = 0x4, scoped, tag = 'scoped memory for tpu_custom_call.1']
    #allocation5 [shape = 'u8[8192]{0}', space=vmem, size = 0x2000, scoped, tag = 'output window, operand 0, single buffered']
    %11 = vsyncpa [#allocation3], 0
    %12 = vsyncpa [#allocation4], 0
    // Predicated region
    $region2: #{tpu_custom_call.1} parent=1 // pred_check
      _
    $region3: #{tpu_custom_call.1} parent=1 // pred_check_branch
      %14 = sbr.rel (0) target = $region5
    $region4: #{tpu_custom_call.1} parent=1 // pred_region
      _
    $region5: #{tpu_custom_call.1} parent=1 // pred_fallthru
      _
    // Predicated region
    $region6: #{tpu_custom_call.1} parent=1 // pred_check
      _
    $region7: #{tpu_custom_call.1} parent=1 // pred_check_branch
      %16 = sbr.rel (0) target = $region9
    $region8: #{tpu_custom_call.1} parent=1 // pred_region
      _
    $region9: #{tpu_custom_call.1} parent=1 // pred_fallthru
      _
    // Predicated region
    $region10: #{tpu_custom_call.1} parent=1 // pred_check
      _
    $region11: #{tpu_custom_call.1} parent=1 // pred_check_branch
      %18 = sbr.rel (0) target = $region13
    $region12: #{tpu_custom_call.1} parent=1 // pred_region
      %s20 = ssub.s32 4096, 4096
      %21 = vsyncadd [#allocation3], %s20
      %s22 = sshll.u32 [#allocation2], 4
      %s23 = int_to_ptr.vmem [resolvable:$true] %s22
      %28 = dma.hbm_to_vmem [thread:$0]  %s2, 4096, %s23, [#allocation3], 128, 128, 8
    $region13: #{tpu_custom_call.1} parent=1 // pred_fallthru
      _
    // Predicated region
    $region14: #{tpu_custom_call.1} parent=1 // pred_check
      _
    $region15: #{tpu_custom_call.1} parent=1 // pred_check_branch
      %30 = sbr.rel (0) target = $region17
    $region16: #{tpu_custom_call.1} parent=1 // pred_region
      _
    $region17: #{tpu_custom_call.1} parent=1 // pred_fallthru
      _
    // Predicated region
    $region18: #{tpu_custom_call.1} parent=1 // pred_check
      _
    $region19: #{tpu_custom_call.1} parent=1 // pred_check_branch
      %32 = sbr.rel (0) target = $region21
    $region20: #{tpu_custom_call.1} parent=1 // pred_region
      _
    $region21: #{tpu_custom_call.1} parent=1 // pred_fallthru
      _
    // Predicated region
    $region22: #{tpu_custom_call.1} parent=1 // pred_check
      _
    $region23: #{tpu_custom_call.1} parent=1 // pred_check_branch
      %34 = sbr.rel (0) target = $region25
    $region24: #{tpu_custom_call.1} parent=1 // pred_region
      _
    $region25: #{tpu_custom_call.1} parent=1 // pred_fallthru
      _
    // Predicated region
    $region26: #{tpu_custom_call.1} parent=1 // pred_check
      _
    $region27: #{tpu_custom_call.1} parent=1 // pred_check_branch
      %36 = sbr.rel (0) target = $region29
    $region28: #{tpu_custom_call.1} parent=1 // pred_region
      %37 = dma.done [#allocation3], 4096
    $region29: #{tpu_custom_call.1} parent=1 // pred_fallthru
      _
    %v38 = vld [vmem:[%s0] sm:$0xff]
    %v39 = vld [vmem:[%s0 + $0x8] sm:$0xff]
    %v40 = vld [vmem:[%s4] sm:$0x7]
    %v41 = vld [vmem:[%s1] sm:$0xff]
    %v42 = vld [vmem:[%s1 + $0x8] sm:$0xff]
    %v43 = vld [vmem:[%s1 + $0x10] sm:$0xff]
    %v44 = vld [vmem:[%s1 + $0x18] sm:$0xff]
    %v45 = vlaneseq
    %v46 = vshrl.u32 %v45, 7
    %v47 = vsub.s32 0, %v46
    %v48 = vrot.slane %v40, %v47
    %vm49 = vcmask 261120
    %v51 = vsel %vm49, %v38, 0
    %v54 = vsel %vm49, %v39, 0
    %56 = vmatprep.subr.mxu0 0.0
    %57 = vmatpush1.msra.mxu0 0.0
    %58 = vmatprep.subr.mxu0 0.0
    %59 = vmatpush1.msra.mxu0 0.0
    %60 = vmatprep.subr.mxu0 0.0
    %61 = vmatpush1.msra.mxu0 0.0
    %62 = vmatprep.subr.mxu0 0.0
    %63 = vmatpush1.msra.mxu0 0.0
    %64 = vmatprep.subr.mxu0 0.0
    %65 = vmatpush1.msra.mxu0 0.0
    %66 = vmatprep.subr.mxu0 0.0
    %67 = vmatpush1.msra.mxu0 0.0
    %68 = vmatprep.subr.mxu0 0.0
    %69 = vmatpush1.msra.mxu0 0.0
    %70 = vmatprep.subr.mxu0 0.0
    %71 = vmatpush1.msra.mxu0 0.0
    %72 = vmatprep.subr.mxu0 0.0
    %73 = vmatpush1.msra.mxu0 0.0
    %74 = vmatprep.subr.mxu0 0.0
    %75 = vmatpush1.msra.mxu0 0.0
    %76 = vmatprep.subr.mxu0 0.0
    %77 = vmatpush1.msra.mxu0 0.0
    %78 = vmatprep.subr.mxu0 0.0
    %79 = vmatpush1.msra.mxu0 0.0
    %80 = vmatprep.subr.mxu0 0.0
    %v81 = vand.u32 %v44, 4294901760
    %82 = vmatpush1.msra.mxu0 %v81
    %83 = vmatprep.subr.mxu0 0.0
    %v84 = vand.u32 %v43, 4294901760
    %85 = vmatpush1.msra.mxu0 %v84
    %86 = vmatprep.subr.mxu0 0.0
    %v87 = vand.u32 %v42, 4294901760
    %88 = vmatpush1.msra.mxu0 %v87
    %89 = vmatprep.subr.mxu0 0.0
    %v90 = vand.u32 %v41, 4294901760
    %91 = vmatpush1.msra.mxu0 %v90
    %92 = vmatprep.subr.mxu0 0.0
    %93 = vmatpush2.msra.mxu0 0.0
    %94 = vmatprep.subr.mxu0 0.0
    %95 = vmatpush2.msra.mxu0 0.0
    %96 = vmatprep.subr.mxu0 0.0
    %97 = vmatpush2.msra.mxu0 0.0
    %98 = vmatprep.subr.mxu0 0.0
    %99 = vmatpush2.msra.mxu0 0.0
    %100 = vmatprep.subr.mxu0 0.0
    %101 = vmatpush2.msra.mxu0 0.0
    %102 = vmatprep.subr.mxu0 0.0
    %103 = vmatpush2.msra.mxu0 0.0
    %104 = vmatprep.subr.mxu0 0.0
    %105 = vmatpush2.msra.mxu0 0.0
    %106 = vmatprep.subr.mxu0 0.0
    %107 = vmatpush2.msra.mxu0 0.0
    %108 = vmatprep.subr.mxu0 0.0
    %109 = vmatpush2.msra.mxu0 0.0
    %110 = vmatprep.subr.mxu0 0.0
    %111 = vmatpush2.msra.mxu0 0.0
    %112 = vmatprep.subr.mxu0 0.0
    %113 = vmatpush2.msra.mxu0 0.0
    %114 = vmatprep.subr.mxu0 0.0
    %115 = vmatpush2.msra.mxu0 0.0
    %116 = vmatprep.subr.mxu0 0.0
    %117 = vmatpush2.msra.mxu0 0.0
    %118 = vmatprep.subr.mxu0 0.0
    %119 = vmatpush2.msra.mxu0 0.0
    %120 = vmatprep.subr.mxu0 0.0
    %121 = vmatpush2.msra.mxu0 0.0
    %122 = vmatprep.subr.mxu0 0.0
    %123 = vmatpush2.msra.mxu0 0.0
    %124 = vmatprep.mubr.f32.mxu0 0.0
    %v125 = vand.u32 %v51, 4294901760
    %v126 = vsub.f32 %v51, %v125
    %v127 = vand.u32 %v126, 4294901760
    %v128 = vsub.f32 %v126, %v127
    %v129 = vand.u32 %v128, 4294901760
    %130 = vmatmul.mubr.f32.gmra.mxu0 %v129
    %v131 = vpop.f32.mrf.mxu0
    %v132 = vadd.f32 %v48, %v131
    %v133 = vpop.f32.mrf.mxu0
    %134 = vmatprep.mubr.f32.mxu0 0.0
    %v135 = vand.u32 %v54, 4294901760
    %v136 = vsub.f32 %v54, %v135
    %v137 = vand.u32 %v136, 4294901760
    %v138 = vsub.f32 %v136, %v137
    %v139 = vand.u32 %v138, 4294901760
    %140 = vmatmul.mubr.f32.gmra.mxu0 %v139
    %v141 = vpop.f32.mrf.mxu0
    %v142 = vadd.f32 %v48, %v141
    %v143 = vpop.f32.mrf.mxu0
    %144 = vdwg.mxu0
    %145 = vmatprep.subr.mxu0 0.0
    %146 = vmatpush1.msra.mxu0 0.0
    %147 = vmatprep.subr.mxu0 0.0
    %148 = vmatpush1.msra.mxu0 0.0
    %149 = vmatprep.subr.mxu0 0.0
    %150 = vmatpush1.msra.mxu0 0.0
    %151 = vmatprep.subr.mxu0 0.0
    %152 = vmatpush1.msra.mxu0 0.0
    %153 = vmatprep.subr.mxu0 0.0
    %154 = vmatpush1.msra.mxu0 0.0
    %155 = vmatprep.subr.mxu0 0.0
    %156 = vmatpush1.msra.mxu0 0.0
    %157 = vmatprep.subr.mxu0 0.0
    %158 = vmatpush1.msra.mxu0 0.0
    %159 = vmatprep.subr.mxu0 0.0
    %160 = vmatpush1.msra.mxu0 0.0
    %161 = vmatprep.subr.mxu0 0.0
    %162 = vmatpush1.msra.mxu0 0.0
    %163 = vmatprep.subr.mxu0 0.0
    %164 = vmatpush1.msra.mxu0 0.0
    %165 = vmatprep.subr.mxu0 0.0
    %166 = vmatpush1.msra.mxu0 0.0
    %167 = vmatprep.subr.mxu0 0.0
    %168 = vmatpush1.msra.mxu0 0.0
    %169 = vmatprep.subr.mxu0 0.0
    %v170 = vand.u32 %v44, 4294901760
    %v171 = vsub.f32 %v44, %v170
    %v172 = vand.u32 %v171, 4294901760
    %v173 = vsub.f32 %v171, %v172
    %v174 = vand.u32 %v173, 4294901760
    %175 = vmatpush1.msra.mxu0 %v174
    %176 = vmatprep.subr.mxu0 0.0
    %v177 = vand.u32 %v43, 4294901760
    %v178 = vsub.f32 %v43, %v177
    %v179 = vand.u32 %v178, 4294901760
    %v180 = vsub.f32 %v178, %v179
    %v181 = vand.u32 %v180, 4294901760
    %182 = vmatpush1.msra.mxu0 %v181
    %183 = vmatprep.subr.mxu0 0.0
    %v184 = vand.u32 %v42, 4294901760
    %v185 = vsub.f32 %v42, %v184
    %v186 = vand.u32 %v185, 4294901760
    %v187 = vsub.f32 %v185, %v186
    %v188 = vand.u32 %v187, 4294901760
    %189 = vmatpush1.msra.mxu0 %v188
    %190 = vmatprep.subr.mxu0 0.0
    %v191 = vand.u32 %v41, 4294901760
    %v192 = vsub.f32 %v41, %v191
    %v193 = vand.u32 %v192, 4294901760
    %v194 = vsub.f32 %v192, %v193
    %v195 = vand.u32 %v194, 4294901760
    %196 = vmatpush1.msra.mxu0 %v195
    %197 = vmatprep.subr.mxu0 0.0
    %198 = vmatpush2.msra.mxu0 0.0
    %199 = vmatprep.subr.mxu0 0.0
    %200 = vmatpush2.msra.mxu0 0.0
    %201 = vmatprep.subr.mxu0 0.0
    %202 = vmatpush2.msra.mxu0 0.0
    %203 = vmatprep.subr.mxu0 0.0
    %204 = vmatpush2.msra.mxu0 0.0
    %205 = vmatprep.subr.mxu0 0.0
    %206 = vmatpush2.msra.mxu0 0.0
    %207 = vmatprep.subr.mxu0 0.0
    %208 = vmatpush2.msra.mxu0 0.0
    %209 = vmatprep.subr.mxu0 0.0
    %210 = vmatpush2.msra.mxu0 0.0
    %211 = vmatprep.subr.mxu0 0.0
    %212 = vmatpush2.msra.mxu0 0.0
    %213 = vmatprep.subr.mxu0 0.0
    %214 = vmatpush2.msra.mxu0 0.0
    %215 = vmatprep.subr.mxu0 0.0
    %216 = vmatpush2.msra.mxu0 0.0
    %217 = vmatprep.subr.mxu0 0.0
    %218 = vmatpush2.msra.mxu0 0.0
    %219 = vmatprep.subr.mxu0 0.0
    %220 = vmatpush2.msra.mxu0 0.0
    %221 = vmatprep.subr.mxu0 0.0
    %222 = vmatpush2.msra.mxu0 0.0
    %223 = vmatprep.subr.mxu0 0.0
    %224 = vmatpush2.msra.mxu0 0.0
    %225 = vmatprep.subr.mxu0 0.0
    %226 = vmatpush2.msra.mxu0 0.0
    %227 = vmatprep.subr.mxu0 0.0
    %228 = vmatpush2.msra.mxu0 0.0
    %229 = vmatprep.mubr.f32.mxu0 0.0
    %v230 = vand.u32 %v51, 4294901760
    %231 = vmatmul.mubr.f32.gmra.mxu0 %v230
    %v232 = vpop.f32.mrf.mxu0
    %v233 = vadd.f32 %v132, %v232
    %v234 = vpop.f32.mrf.mxu0
    %235 = vmatprep.mubr.f32.mxu0 0.0
    %v236 = vand.u32 %v54, 4294901760
    %237 = vmatmul.mubr.f32.gmra.mxu0 %v236
    %v238 = vpop.f32.mrf.mxu0
    %v239 = vadd.f32 %v142, %v238
    %v240 = vpop.f32.mrf.mxu0
    %241 = vdwg.mxu0
    %242 = vmatprep.subr.mxu0 0.0
    %243 = vmatpush1.msra.mxu0 0.0
    %244 = vmatprep.subr.mxu0 0.0
    %245 = vmatpush1.msra.mxu0 0.0
    %246 = vmatprep.subr.mxu0 0.0
    %247 = vmatpush1.msra.mxu0 0.0
    %248 = vmatprep.subr.mxu0 0.0
    %249 = vmatpush1.msra.mxu0 0.0
    %250 = vmatprep.subr.mxu0 0.0
    %251 = vmatpush1.msra.mxu0 0.0
    %252 = vmatprep.subr.mxu0 0.0
    %253 = vmatpush1.msra.mxu0 0.0
    %254 = vmatprep.subr.mxu0 0.0
    %255 = vmatpush1.msra.mxu0 0.0
    %256 = vmatprep.subr.mxu0 0.0
    %257 = vmatpush1.msra.mxu0 0.0
    %258 = vmatprep.subr.mxu0 0.0
    %259 = vmatpush1.msra.mxu0 0.0
    %260 = vmatprep.subr.mxu0 0.0
    %261 = vmatpush1.msra.mxu0 0.0
    %262 = vmatprep.subr.mxu0 0.0
    %263 = vmatpush1.msra.mxu0 0.0
    %264 = vmatprep.subr.mxu0 0.0
    %265 = vmatpush1.msra.mxu0 0.0
    %266 = vmatprep.subr.mxu0 0.0
    %v267 = vand.u32 %v44, 4294901760
    %v268 = vsub.f32 %v44, %v267
    %269 = vmatpush1.msra.mxu0 %v268
    %270 = vmatprep.subr.mxu0 0.0
    %v271 = vand.u32 %v43, 4294901760
    %v272 = vsub.f32 %v43, %v271
    %273 = vmatpush1.msra.mxu0 %v272
    %274 = vmatprep.subr.mxu0 0.0
    %v275 = vand.u32 %v42, 4294901760
    %v276 = vsub.f32 %v42, %v275
    %277 = vmatpush1.msra.mxu0 %v276
    %278 = vmatprep.subr.mxu0 0.0
    %v279 = vand.u32 %v41, 4294901760
    %v280 = vsub.f32 %v41, %v279
    %281 = vmatpush1.msra.mxu0 %v280
    %282 = vmatprep.subr.mxu0 0.0
    %283 = vmatpush2.msra.mxu0 0.0
    %284 = vmatprep.subr.mxu0 0.0
    %285 = vmatpush2.msra.mxu0 0.0
    %286 = vmatprep.subr.mxu0 0.0
    %287 = vmatpush2.msra.mxu0 0.0
    %288 = vmatprep.subr.mxu0 0.0
    %289 = vmatpush2.msra.mxu0 0.0
    %290 = vmatprep.subr.mxu0 0.0
    %291 = vmatpush2.msra.mxu0 0.0
    %292 = vmatprep.subr.mxu0 0.0
    %293 = vmatpush2.msra.mxu0 0.0
    %294 = vmatprep.subr.mxu0 0.0
    %295 = vmatpush2.msra.mxu0 0.0
    %296 = vmatprep.subr.mxu0 0.0
    %297 = vmatpush2.msra.mxu0 0.0
    %298 = vmatprep.subr.mxu0 0.0
    %299 = vmatpush2.msra.mxu0 0.0
    %300 = vmatprep.subr.mxu0 0.0
    %301 = vmatpush2.msra.mxu0 0.0
    %302 = vmatprep.subr.mxu0 0.0
    %303 = vmatpush2.msra.mxu0 0.0
    %304 = vmatprep.subr.mxu0 0.0
    %305 = vmatpush2.msra.mxu0 0.0
    %306 = vmatprep.subr.mxu0 0.0
    %307 = vmatpush2.msra.mxu0 0.0
    %308 = vmatprep.subr.mxu0 0.0
    %309 = vmatpush2.msra.mxu0 0.0
    %310 = vmatprep.subr.mxu0 0.0
    %311 = vmatpush2.msra.mxu0 0.0
    %312 = vmatprep.subr.mxu0 0.0
    %313 = vmatpush2.msra.mxu0 0.0
    %314 = vmatprep.mubr.f32.mxu0 0.0
    %v315 = vand.u32 %v51, 4294901760
    %v316 = vsub.f32 %v51, %v315
    %317 = vmatmul.mubr.f32.gmra.mxu0 %v316
    %v318 = vpop.f32.mrf.mxu0
    %v319 = vadd.f32 %v233, %v318
    %v320 = vpop.f32.mrf.mxu0
    %321 = vmatprep.mubr.f32.mxu0 0.0
    %v322 = vand.u32 %v54, 4294901760
    %v323 = vsub.f32 %v54, %v322
    %324 = vmatmul.mubr.f32.gmra.mxu0 %v323
    %v325 = vpop.f32.mrf.mxu0
    %v326 = vadd.f32 %v239, %v325
    %v327 = vpop.f32.mrf.mxu0
    %328 = vdwg.mxu0
    %329 = vmatprep.subr.mxu0 0.0
    %330 = vmatpush1.msra.mxu0 0.0
    %331 = vmatprep.subr.mxu0 0.0
    %332 = vmatpush1.msra.mxu0 0.0
    %333 = vmatprep.subr.mxu0 0.0
    %334 = vmatpush1.msra.mxu0 0.0
    %335 = vmatprep.subr.mxu0 0.0
    %336 = vmatpush1.msra.mxu0 0.0
    %337 = vmatprep.subr.mxu0 0.0
    %338 = vmatpush1.msra.mxu0 0.0
    %339 = vmatprep.subr.mxu0 0.0
    %340 = vmatpush1.msra.mxu0 0.0
    %341 = vmatprep.subr.mxu0 0.0
    %342 = vmatpush1.msra.mxu0 0.0
    %343 = vmatprep.subr.mxu0 0.0
    %344 = vmatpush1.msra.mxu0 0.0
    %345 = vmatprep.subr.mxu0 0.0
    %346 = vmatpush1.msra.mxu0 0.0
    %347 = vmatprep.subr.mxu0 0.0
    %348 = vmatpush1.msra.mxu0 0.0
    %349 = vmatprep.subr.mxu0 0.0
    %350 = vmatpush1.msra.mxu0 0.0
    %351 = vmatprep.subr.mxu0 0.0
    %352 = vmatpush1.msra.mxu0 0.0
    %353 = vmatprep.subr.mxu0 0.0
    %v354 = vand.u32 %v44, 4294901760
    %355 = vmatpush1.msra.mxu0 %v354
    %356 = vmatprep.subr.mxu0 0.0
    %v357 = vand.u32 %v43, 4294901760
    %358 = vmatpush1.msra.mxu0 %v357
    %359 = vmatprep.subr.mxu0 0.0
    %v360 = vand.u32 %v42, 4294901760
    %361 = vmatpush1.msra.mxu0 %v360
    %362 = vmatprep.subr.mxu0 0.0
    %v363 = vand.u32 %v41, 4294901760
    %364 = vmatpush1.msra.mxu0 %v363
    %365 = vmatprep.subr.mxu0 0.0
    %366 = vmatpush2.msra.mxu0 0.0
    %367 = vmatprep.subr.mxu0 0.0
    %368 = vmatpush2.msra.mxu0 0.0
    %369 = vmatprep.subr.mxu0 0.0
    %370 = vmatpush2.msra.mxu0 0.0
    %371 = vmatprep.subr.mxu0 0.0
    %372 = vmatpush2.msra.mxu0 0.0
    %373 = vmatprep.subr.mxu0 0.0
    %374 = vmatpush2.msra.mxu0 0.0
    %375 = vmatprep.subr.mxu0 0.0
    %376 = vmatpush2.msra.mxu0 0.0
    %377 = vmatprep.subr.mxu0 0.0
    %378 = vmatpush2.msra.mxu0 0.0
    %379 = vmatprep.subr.mxu0 0.0
    %380 = vmatpush2.msra.mxu0 0.0
    %381 = vmatprep.subr.mxu0 0.0
    %382 = vmatpush2.msra.mxu0 0.0
    %383 = vmatprep.subr.mxu0 0.0
    %384 = vmatpush2.msra.mxu0 0.0
    %385 = vmatprep.subr.mxu0 0.0
    %386 = vmatpush2.msra.mxu0 0.0
    %387 = vmatprep.subr.mxu0 0.0
    %388 = vmatpush2.msra.mxu0 0.0
    %389 = vmatprep.subr.mxu0 0.0
    %390 = vmatpush2.msra.mxu0 0.0
    %391 = vmatprep.subr.mxu0 0.0
    %392 = vmatpush2.msra.mxu0 0.0
    %393 = vmatprep.subr.mxu0 0.0
    %394 = vmatpush2.msra.mxu0 0.0
    %395 = vmatprep.subr.mxu0 0.0
    %396 = vmatpush2.msra.mxu0 0.0
    %397 = vmatprep.mubr.f32.mxu0 0.0
    %v398 = vand.u32 %v51, 4294901760
    %v399 = vsub.f32 %v51, %v398
    %v400 = vand.u32 %v399, 4294901760
    %401 = vmatmul.mubr.f32.gmra.mxu0 %v400
    %v402 = vpop.f32.mrf.mxu0
    %v403 = vadd.f32 %v319, %v402
    %v404 = vpop.f32.mrf.mxu0
    %405 = vmatprep.mubr.f32.mxu0 0.0
    %v406 = vand.u32 %v54, 4294901760
    %v407 = vsub.f32 %v54, %v406
    %v408 = vand.u32 %v407, 4294901760
    %409 = vmatmul.mubr.f32.gmra.mxu0 %v408
    %v410 = vpop.f32.mrf.mxu0
    %v411 = vadd.f32 %v326, %v410
    %v412 = vpop.f32.mrf.mxu0
    %413 = vdwg.mxu0
    %414 = vmatprep.subr.mxu0 0.0
    %415 = vmatpush1.msra.mxu0 0.0
    %416 = vmatprep.subr.mxu0 0.0
    %417 = vmatpush1.msra.mxu0 0.0
    %418 = vmatprep.subr.mxu0 0.0
    %419 = vmatpush1.msra.mxu0 0.0
    %420 = vmatprep.subr.mxu0 0.0
    %421 = vmatpush1.msra.mxu0 0.0
    %422 = vmatprep.subr.mxu0 0.0
    %423 = vmatpush1.msra.mxu0 0.0
    %424 = vmatprep.subr.mxu0 0.0
    %425 = vmatpush1.msra.mxu0 0.0
    %426 = vmatprep.subr.mxu0 0.0
    %427 = vmatpush1.msra.mxu0 0.0
    %428 = vmatprep.subr.mxu0 0.0
    %429 = vmatpush1.msra.mxu0 0.0
    %430 = vmatprep.subr.mxu0 0.0
    %431 = vmatpush1.msra.mxu0 0.0
    %432 = vmatprep.subr.mxu0 0.0
    %433 = vmatpush1.msra.mxu0 0.0
    %434 = vmatprep.subr.mxu0 0.0
    %435 = vmatpush1.msra.mxu0 0.0
    %436 = vmatprep.subr.mxu0 0.0
    %437 = vmatpush1.msra.mxu0 0.0
    %438 = vmatprep.subr.mxu0 0.0
    %v439 = vand.u32 %v44, 4294901760
    %v440 = vsub.f32 %v44, %v439
    %v441 = vand.u32 %v440, 4294901760
    %442 = vmatpush1.msra.mxu0 %v441
    %443 = vmatprep.subr.mxu0 0.0
    %v444 = vand.u32 %v43, 4294901760
    %v445 = vsub.f32 %v43, %v444
    %v446 = vand.u32 %v445, 4294901760
    %447 = vmatpush1.msra.mxu0 %v446
    %448 = vmatprep.subr.mxu0 0.0
    %v449 = vand.u32 %v42, 4294901760
    %v450 = vsub.f32 %v42, %v449
    %v451 = vand.u32 %v450, 4294901760
    %452 = vmatpush1.msra.mxu0 %v451
    %453 = vmatprep.subr.mxu0 0.0
    %v454 = vand.u32 %v41, 4294901760
    %v455 = vsub.f32 %v41, %v454
    %v456 = vand.u32 %v455, 4294901760
    %457 = vmatpush1.msra.mxu0 %v456
    %458 = vmatprep.subr.mxu0 0.0
    %459 = vmatpush2.msra.mxu0 0.0
    %460 = vmatprep.subr.mxu0 0.0
    %461 = vmatpush2.msra.mxu0 0.0
    %462 = vmatprep.subr.mxu0 0.0
    %463 = vmatpush2.msra.mxu0 0.0
    %464 = vmatprep.subr.mxu0 0.0
    %465 = vmatpush2.msra.mxu0 0.0
    %466 = vmatprep.subr.mxu0 0.0
    %467 = vmatpush2.msra.mxu0 0.0
    %468 = vmatprep.subr.mxu0 0.0
    %469 = vmatpush2.msra.mxu0 0.0
    %470 = vmatprep.subr.mxu0 0.0
    %471 = vmatpush2.msra.mxu0 0.0
    %472 = vmatprep.subr.mxu0 0.0
    %473 = vmatpush2.msra.mxu0 0.0
    %474 = vmatprep.subr.mxu0 0.0
    %475 = vmatpush2.msra.mxu0 0.0
    %476 = vmatprep.subr.mxu0 0.0
    %477 = vmatpush2.msra.mxu0 0.0
    %478 = vmatprep.subr.mxu0 0.0
    %479 = vmatpush2.msra.mxu0 0.0
    %480 = vmatprep.subr.mxu0 0.0
    %481 = vmatpush2.msra.mxu0 0.0
    %482 = vmatprep.subr.mxu0 0.0
    %483 = vmatpush2.msra.mxu0 0.0
    %484 = vmatprep.subr.mxu0 0.0
    %485 = vmatpush2.msra.mxu0 0.0
    %486 = vmatprep.subr.mxu0 0.0
    %487 = vmatpush2.msra.mxu0 0.0
    %488 = vmatprep.subr.mxu0 0.0
    %489 = vmatpush2.msra.mxu0 0.0
    %490 = vmatprep.mubr.f32.mxu0 0.0
    %v491 = vand.u32 %v51, 4294901760
    %492 = vmatmul.mubr.f32.gmra.mxu0 %v491
    %v493 = vpop.f32.mrf.mxu0
    %v494 = vadd.f32 %v403, %v493
    %v495 = vpop.f32.mrf.mxu0
    %496 = vmatprep.mubr.f32.mxu0 0.0
    %v497 = vand.u32 %v54, 4294901760
    %498 = vmatmul.mubr.f32.gmra.mxu0 %v497
    %v499 = vpop.f32.mrf.mxu0
    %v500 = vadd.f32 %v411, %v499
    %v501 = vpop.f32.mrf.mxu0
    %502 = vdwg.mxu0
    %503 = vmatprep.subr.mxu0 0.0
    %504 = vmatpush1.msra.mxu0 0.0
    %505 = vmatprep.subr.mxu0 0.0
    %506 = vmatpush1.msra.mxu0 0.0
    %507 = vmatprep.subr.mxu0 0.0
    %508 = vmatpush1.msra.mxu0 0.0
    %509 = vmatprep.subr.mxu0 0.0
    %510 = vmatpush1.msra.mxu0 0.0
    %511 = vmatprep.subr.mxu0 0.0
    %512 = vmatpush1.msra.mxu0 0.0
    %513 = vmatprep.subr.mxu0 0.0
    %514 = vmatpush1.msra.mxu0 0.0
    %515 = vmatprep.subr.mxu0 0.0
    %516 = vmatpush1.msra.mxu0 0.0
    %517 = vmatprep.subr.mxu0 0.0
    %518 = vmatpush1.msra.mxu0 0.0
    %519 = vmatprep.subr.mxu0 0.0
    %520 = vmatpush1.msra.mxu0 0.0
    %521 = vmatprep.subr.mxu0 0.0
    %522 = vmatpush1.msra.mxu0 0.0
    %523 = vmatprep.subr.mxu0 0.0
    %524 = vmatpush1.msra.mxu0 0.0
    %525 = vmatprep.subr.mxu0 0.0
    %526 = vmatpush1.msra.mxu0 0.0
    %527 = vmatprep.subr.mxu0 0.0
    %v528 = vand.u32 %v44, 4294901760
    %529 = vmatpush1.msra.mxu0 %v528
    %530 = vmatprep.subr.mxu0 0.0
    %v531 = vand.u32 %v43, 4294901760
    %532 = vmatpush1.msra.mxu0 %v531
    %533 = vmatprep.subr.mxu0 0.0
    %v534 = vand.u32 %v42, 4294901760
    %535 = vmatpush1.msra.mxu0 %v534
    %536 = vmatprep.subr.mxu0 0.0
    %v537 = vand.u32 %v41, 4294901760
    %538 = vmatpush1.msra.mxu0 %v537
    %539 = vmatprep.subr.mxu0 0.0
    %540 = vmatpush2.msra.mxu0 0.0
    %541 = vmatprep.subr.mxu0 0.0
    %542 = vmatpush2.msra.mxu0 0.0
    %543 = vmatprep.subr.mxu0 0.0
    %544 = vmatpush2.msra.mxu0 0.0
    %545 = vmatprep.subr.mxu0 0.0
    %546 = vmatpush2.msra.mxu0 0.0
    %547 = vmatprep.subr.mxu0 0.0
    %548 = vmatpush2.msra.mxu0 0.0
    %549 = vmatprep.subr.mxu0 0.0
    %550 = vmatpush2.msra.mxu0 0.0
    %551 = vmatprep.subr.mxu0 0.0
    %552 = vmatpush2.msra.mxu0 0.0
    %553 = vmatprep.subr.mxu0 0.0
    %554 = vmatpush2.msra.mxu0 0.0
    %555 = vmatprep.subr.mxu0 0.0
    %556 = vmatpush2.msra.mxu0 0.0
    %557 = vmatprep.subr.mxu0 0.0
    %558 = vmatpush2.msra.mxu0 0.0
    %559 = vmatprep.subr.mxu0 0.0
    %560 = vmatpush2.msra.mxu0 0.0
    %561 = vmatprep.subr.mxu0 0.0
    %562 = vmatpush2.msra.mxu0 0.0
    %563 = vmatprep.subr.mxu0 0.0
    %564 = vmatpush2.msra.mxu0 0.0
    %565 = vmatprep.subr.mxu0 0.0
    %566 = vmatpush2.msra.mxu0 0.0
    %567 = vmatprep.subr.mxu0 0.0
    %568 = vmatpush2.msra.mxu0 0.0
    %569 = vmatprep.subr.mxu0 0.0
    %570 = vmatpush2.msra.mxu0 0.0
    %571 = vmatprep.mubr.f32.mxu0 0.0
    %v572 = vand.u32 %v51, 4294901760
    %573 = vmatmul.mubr.f32.gmra.mxu0 %v572
    %v574 = vpop.f32.mrf.mxu0
    %v575 = vadd.f32 %v494, %v574
    %v576 = vpop.f32.mrf.mxu0
    %577 = vmatprep.mubr.f32.mxu0 0.0
    %v578 = vand.u32 %v54, 4294901760
    %579 = vmatmul.mubr.f32.gmra.mxu0 %v578
    %v580 = vpop.f32.mrf.mxu0
    %v581 = vadd.f32 %v500, %v580
    %v582 = vpop.f32.mrf.mxu0
    %583 = vdwg.mxu0
    %vm584 = vcmp.gt.f32.partialorder %v575, 0.0
    %vm585 = vcmp.gt.f32.partialorder %v581, 0.0
    %v586 = vmul.f32 %v575, 0.01
    %v587 = vmul.f32 %v581, 0.01
    %v588 = vsel %vm584, %v575, %v586
    %v589 = vsel %vm585, %v581, %v587
    %v590 = vld [vmem:[#allocation2] sm:$0xff]
    %v591 = vld [vmem:[#allocation2 + $0x8] sm:$0xff]
    %v592 = vld [vmem:[#allocation2 + $0x10] sm:$0xff]
    %v593 = vld [vmem:[#allocation2 + $0x18] sm:$0xff]
    %v594 = vld [vmem:[#allocation2 + $0x20] sm:$0xff]
    %v595 = vld [vmem:[#allocation2 + $0x28] sm:$0xff]
    %v596 = vld [vmem:[#allocation2 + $0x30] sm:$0xff]
    %v597 = vld [vmem:[#allocation2 + $0x38] sm:$0xff]
    %v598 = vld [vmem:[#allocation2 + $0x40] sm:$0xff]
    %v599 = vld [vmem:[#allocation2 + $0x48] sm:$0xff]
    %v600 = vld [vmem:[#allocation2 + $0x50] sm:$0xff]
    %v601 = vld [vmem:[#allocation2 + $0x58] sm:$0xff]
    %v602 = vld [vmem:[#allocation2 + $0x60] sm:$0xff]
    %v603 = vld [vmem:[#allocation2 + $0x68] sm:$0xff]
    %v604 = vld [vmem:[#allocation2 + $0x70] sm:$0xff]
    %v605 = vld [vmem:[#allocation2 + $0x78] sm:$0xff]
    %v606 = vlaneseq
    %v607 = vshrl.u32 %v606, 7
    %v608 = vsub.s32 1, %v607
    %v609 = vrot.slane %v40, %v608
    %610 = vmatprep.subr.mxu0 0.0
    %v611 = vand.u32 %v605, 4294901760
    %612 = vmatpush1.msra.mxu0 %v611
    %613 = vmatprep.subr.mxu0 0.0
    %v614 = vand.u32 %v604, 4294901760
    %615 = vmatpush1.msra.mxu0 %v614
    %616 = vmatprep.subr.mxu0 0.0
    %v617 = vand.u32 %v603, 4294901760
    %618 = vmatpush1.msra.mxu0 %v617
    %619 = vmatprep.subr.mxu0 0.0
    %v620 = vand.u32 %v602, 4294901760
    %621 = vmatpush1.msra.mxu0 %v620
    %622 = vmatprep.subr.mxu0 0.0
    %v623 = vand.u32 %v601, 4294901760
    %624 = vmatpush1.msra.mxu0 %v623
    %625 = vmatprep.subr.mxu0 0.0
    %v626 = vand.u32 %v600, 4294901760
    %627 = vmatpush1.msra.mxu0 %v626
    %628 = vmatprep.subr.mxu0 0.0
    %v629 = vand.u32 %v599, 4294901760
    %630 = vmatpush1.msra.mxu0 %v629
    %631 = vmatprep.subr.mxu0 0.0
    %v632 = vand.u32 %v598, 4294901760
    %633 = vmatpush1.msra.mxu0 %v632
    %634 = vmatprep.subr.mxu0 0.0
    %v635 = vand.u32 %v597, 4294901760
    %636 = vmatpush1.msra.mxu0 %v635
    %637 = vmatprep.subr.mxu0 0.0
    %v638 = vand.u32 %v596, 4294901760
    %639 = vmatpush1.msra.mxu0 %v638
    %640 = vmatprep.subr.mxu0 0.0
    %v641 = vand.u32 %v595, 4294901760
    %642 = vmatpush1.msra.mxu0 %v641
    %643 = vmatprep.subr.mxu0 0.0
    %v644 = vand.u32 %v594, 4294901760
    %645 = vmatpush1.msra.mxu0 %v644
    %646 = vmatprep.subr.mxu0 0.0
    %v647 = vand.u32 %v593, 4294901760
    %648 = vmatpush1.msra.mxu0 %v647
    %649 = vmatprep.subr.mxu0 0.0
    %v650 = vand.u32 %v592, 4294901760
    %651 = vmatpush1.msra.mxu0 %v650
    %652 = vmatprep.subr.mxu0 0.0
    %v653 = vand.u32 %v591, 4294901760
    %654 = vmatpush1.msra.mxu0 %v653
    %655 = vmatprep.subr.mxu0 0.0
    %v656 = vand.u32 %v590, 4294901760
    %657 = vmatpush1.msra.mxu0 %v656
    %658 = vmatprep.subr.mxu0 0.0
    %659 = vmatpush2.msra.mxu0 0.0
    %660 = vmatprep.subr.mxu0 0.0
    %661 = vmatpush2.msra.mxu0 0.0
    %662 = vmatprep.subr.mxu0 0.0
    %663 = vmatpush2.msra.mxu0 0.0
    %664 = vmatprep.subr.mxu0 0.0
    %665 = vmatpush2.msra.mxu0 0.0
    %666 = vmatprep.subr.mxu0 0.0
    %667 = vmatpush2.msra.mxu0 0.0
    %668 = vmatprep.subr.mxu0 0.0
    %669 = vmatpush2.msra.mxu0 0.0
    %670 = vmatprep.subr.mxu0 0.0
    %671 = vmatpush2.msra.mxu0 0.0
    %672 = vmatprep.subr.mxu0 0.0
    %673 = vmatpush2.msra.mxu0 0.0
    %674 = vmatprep.subr.mxu0 0.0
    %675 = vmatpush2.msra.mxu0 0.0
    %676 = vmatprep.subr.mxu0 0.0
    %677 = vmatpush2.msra.mxu0 0.0
    %678 = vmatprep.subr.mxu0 0.0
    %679 = vmatpush2.msra.mxu0 0.0
    %680 = vmatprep.subr.mxu0 0.0
    %681 = vmatpush2.msra.mxu0 0.0
    %682 = vmatprep.subr.mxu0 0.0
    %683 = vmatpush2.msra.mxu0 0.0
    %684 = vmatprep.subr.mxu0 0.0
    %685 = vmatpush2.msra.mxu0 0.0
    %686 = vmatprep.subr.mxu0 0.0
    %687 = vmatpush2.msra.mxu0 0.0
    %688 = vmatprep.subr.mxu0 0.0
    %689 = vmatpush2.msra.mxu0 0.0
    %690 = vmatprep.mubr.f32.mxu0 0.0
    %v691 = vand.u32 %v588, 4294901760
    %v692 = vsub.f32 %v588, %v691
    %v693 = vand.u32 %v692, 4294901760
    %v694 = vsub.f32 %v692, %v693
    %v695 = vand.u32 %v694, 4294901760
    %696 = vmatmul.mubr.f32.gmra.mxu0 %v695
    %v697 = vpop.f32.mrf.mxu0
    %v698 = vadd.f32 %v609, %v697
    %v699 = vpop.f32.mrf.mxu0
    %700 = vmatprep.mubr.f32.mxu0 0.0
    %v701 = vand.u32 %v589, 4294901760
    %v702 = vsub.f32 %v589, %v701
    %v703 = vand.u32 %v702, 4294901760
    %v704 = vsub.f32 %v702, %v703
    %v705 = vand.u32 %v704, 4294901760
    %706 = vmatmul.mubr.f32.gmra.mxu0 %v705
    %v707 = vpop.f32.mrf.mxu0
    %v708 = vadd.f32 %v609, %v707
    %v709 = vpop.f32.mrf.mxu0
    %710 = vdwg.mxu0
    %711 = vmatprep.subr.mxu0 0.0
    %v712 = vand.u32 %v605, 4294901760
    %v713 = vsub.f32 %v605, %v712
    %v714 = vand.u32 %v713, 4294901760
    %v715 = vsub.f32 %v713, %v714
    %v716 = vand.u32 %v715, 4294901760
    %717 = vmatpush1.msra.mxu0 %v716
    %718 = vmatprep.subr.mxu0 0.0
    %v719 = vand.u32 %v604, 4294901760
    %v720 = vsub.f32 %v604, %v719
    %v721 = vand.u32 %v720, 4294901760
    %v722 = vsub.f32 %v720, %v721
    %v723 = vand.u32 %v722, 4294901760
    %724 = vmatpush1.msra.mxu0 %v723
    %725 = vmatprep.subr.mxu0 0.0
    %v726 = vand.u32 %v603, 4294901760
    %v727 = vsub.f32 %v603, %v726
    %v728 = vand.u32 %v727, 4294901760
    %v729 = vsub.f32 %v727, %v728
    %v730 = vand.u32 %v729, 4294901760
    %731 = vmatpush1.msra.mxu0 %v730
    %732 = vmatprep.subr.mxu0 0.0
    %v733 = vand.u32 %v602, 4294901760
    %v734 = vsub.f32 %v602, %v733
    %v735 = vand.u32 %v734, 4294901760
    %v736 = vsub.f32 %v734, %v735
    %v737 = vand.u32 %v736, 4294901760
    %738 = vmatpush1.msra.mxu0 %v737
    %739 = vmatprep.subr.mxu0 0.0
    %v740 = vand.u32 %v601, 4294901760
    %v741 = vsub.f32 %v601, %v740
    %v742 = vand.u32 %v741, 4294901760
    %v743 = vsub.f32 %v741, %v742
    %v744 = vand.u32 %v743, 4294901760
    %745 = vmatpush1.msra.mxu0 %v744
    %746 = vmatprep.subr.mxu0 0.0
    %v747 = vand.u32 %v600, 4294901760
    %v748 = vsub.f32 %v600, %v747
    %v749 = vand.u32 %v748, 4294901760
    %v750 = vsub.f32 %v748, %v749
    %v751 = vand.u32 %v750, 4294901760
    %752 = vmatpush1.msra.mxu0 %v751
    %753 = vmatprep.subr.mxu0 0.0
    %v754 = vand.u32 %v599, 4294901760
    %v755 = vsub.f32 %v599, %v754
    %v756 = vand.u32 %v755, 4294901760
    %v757 = vsub.f32 %v755, %v756
    %v758 = vand.u32 %v757, 4294901760
    %759 = vmatpush1.msra.mxu0 %v758
    %760 = vmatprep.subr.mxu0 0.0
    %v761 = vand.u32 %v598, 4294901760
    %v762 = vsub.f32 %v598, %v761
    %v763 = vand.u32 %v762, 4294901760
    %v764 = vsub.f32 %v762, %v763
    %v765 = vand.u32 %v764, 4294901760
    %766 = vmatpush1.msra.mxu0 %v765
    %767 = vmatprep.subr.mxu0 0.0
    %v768 = vand.u32 %v597, 4294901760
    %v769 = vsub.f32 %v597, %v768
    %v770 = vand.u32 %v769, 4294901760
    %v771 = vsub.f32 %v769, %v770
    %v772 = vand.u32 %v771, 4294901760
    %773 = vmatpush1.msra.mxu0 %v772
    %774 = vmatprep.subr.mxu0 0.0
    %v775 = vand.u32 %v596, 4294901760
    %v776 = vsub.f32 %v596, %v775
    %v777 = vand.u32 %v776, 4294901760
    %v778 = vsub.f32 %v776, %v777
    %v779 = vand.u32 %v778, 4294901760
    %780 = vmatpush1.msra.mxu0 %v779
    %781 = vmatprep.subr.mxu0 0.0
    %v782 = vand.u32 %v595, 4294901760
    %v783 = vsub.f32 %v595, %v782
    %v784 = vand.u32 %v783, 4294901760
    %v785 = vsub.f32 %v783, %v784
    %v786 = vand.u32 %v785, 4294901760
    %787 = vmatpush1.msra.mxu0 %v786
    %788 = vmatprep.subr.mxu0 0.0
    %v789 = vand.u32 %v594, 4294901760
    %v790 = vsub.f32 %v594, %v789
    %v791 = vand.u32 %v790, 4294901760
    %v792 = vsub.f32 %v790, %v791
    %v793 = vand.u32 %v792, 4294901760
    %794 = vmatpush1.msra.mxu0 %v793
    %795 = vmatprep.subr.mxu0 0.0
    %v796 = vand.u32 %v593, 4294901760
    %v797 = vsub.f32 %v593, %v796
    %v798 = vand.u32 %v797, 4294901760
    %v799 = vsub.f32 %v797, %v798
    %v800 = vand.u32 %v799, 4294901760
    %801 = vmatpush1.msra.mxu0 %v800
    %802 = vmatprep.subr.mxu0 0.0
    %v803 = vand.u32 %v592, 4294901760
    %v804 = vsub.f32 %v592, %v803
    %v805 = vand.u32 %v804, 4294901760
    %v806 = vsub.f32 %v804, %v805
    %v807 = vand.u32 %v806, 4294901760
    %808 = vmatpush1.msra.mxu0 %v807
    %809 = vmatprep.subr.mxu0 0.0
    %v810 = vand.u32 %v591, 4294901760
    %v811 = vsub.f32 %v591, %v810
    %v812 = vand.u32 %v811, 4294901760
    %v813 = vsub.f32 %v811, %v812
    %v814 = vand.u32 %v813, 4294901760
    %815 = vmatpush1.msra.mxu0 %v814
    %816 = vmatprep.subr.mxu0 0.0
    %v817 = vand.u32 %v590, 4294901760
    %v818 = vsub.f32 %v590, %v817
    %v819 = vand.u32 %v818, 4294901760
    %v820 = vsub.f32 %v818, %v819
    %v821 = vand.u32 %v820, 4294901760
    %822 = vmatpush1.msra.mxu0 %v821
    %823 = vmatprep.subr.mxu0 0.0
    %824 = vmatpush2.msra.mxu0 0.0
    %825 = vmatprep.subr.mxu0 0.0
    %826 = vmatpush2.msra.mxu0 0.0
    %827 = vmatprep.subr.mxu0 0.0
    %828 = vmatpush2.msra.mxu0 0.0
    %829 = vmatprep.subr.mxu0 0.0
    %830 = vmatpush2.msra.mxu0 0.0
    %831 = vmatprep.subr.mxu0 0.0
    %832 = vmatpush2.msra.mxu0 0.0
    %833 = vmatprep.subr.mxu0 0.0
    %834 = vmatpush2.msra.mxu0 0.0
    %835 = vmatprep.subr.mxu0 0.0
    %836 = vmatpush2.msra.mxu0 0.0
    %837 = vmatprep.subr.mxu0 0.0
    %838 = vmatpush2.msra.mxu0 0.0
    %839 = vmatprep.subr.mxu0 0.0
    %840 = vmatpush2.msra.mxu0 0.0
    %841 = vmatprep.subr.mxu0 0.0
    %842 = vmatpush2.msra.mxu0 0.0
    %843 = vmatprep.subr.mxu0 0.0
    %844 = vmatpush2.msra.mxu0 0.0
    %845 = vmatprep.subr.mxu0 0.0
    %846 = vmatpush2.msra.mxu0 0.0
    %847 = vmatprep.subr.mxu0 0.0
    %848 = vmatpush2.msra.mxu0 0.0
    %849 = vmatprep.subr.mxu0 0.0
    %850 = vmatpush2.msra.mxu0 0.0
    %851 = vmatprep.subr.mxu0 0.0
    %852 = vmatpush2.msra.mxu0 0.0
    %853 = vmatprep.subr.mxu0 0.0
    %854 = vmatpush2.msra.mxu0 0.0
    %855 = vmatprep.mubr.f32.mxu0 0.0
    %v856 = vand.u32 %v588, 4294901760
    %857 = vmatmul.mubr.f32.gmra.mxu0 %v856
    %v858 = vpop.f32.mrf.mxu0
    %v859 = vadd.f32 %v698, %v858
    %v860 = vpop.f32.mrf.mxu0
    %861 = vmatprep.mubr.f32.mxu0 0.0
    %v862 = vand.u32 %v589, 4294901760
    %863 = vmatmul.mubr.f32.gmra.mxu0 %v862
    %v864 = vpop.f32.mrf.mxu0
    %v865 = vadd.f32 %v708, %v864
    %v866 = vpop.f32.mrf.mxu0
    %867 = vdwg.mxu0
    %868 = vmatprep.subr.mxu0 0.0
    %v869 = vand.u32 %v605, 4294901760
    %v870 = vsub.f32 %v605, %v869
    %871 = vmatpush1.msra.mxu0 %v870
    %872 = vmatprep.subr.mxu0 0.0
    %v873 = vand.u32 %v604, 4294901760
    %v874 = vsub.f32 %v604, %v873
    %875 = vmatpush1.msra.mxu0 %v874
    %876 = vmatprep.subr.mxu0 0.0
    %v877 = vand.u32 %v603, 4294901760
    %v878 = vsub.f32 %v603, %v877
    %879 = vmatpush1.msra.mxu0 %v878
    %880 = vmatprep.subr.mxu0 0.0
    %v881 = vand.u32 %v602, 4294901760
    %v882 = vsub.f32 %v602, %v881
    %883 = vmatpush1.msra.mxu0 %v882
    %884 = vmatprep.subr.mxu0 0.0
    %v885 = vand.u32 %v601, 4294901760
    %v886 = vsub.f32 %v601, %v885
    %887 = vmatpush1.msra.mxu0 %v886
    %888 = vmatprep.subr.mxu0 0.0
    %v889 = vand.u32 %v600, 4294901760
    %v890 = vsub.f32 %v600, %v889
    %891 = vmatpush1.msra.mxu0 %v890
    %892 = vmatprep.subr.mxu0 0.0
    %v893 = vand.u32 %v599, 4294901760
    %v894 = vsub.f32 %v599, %v893
    %895 = vmatpush1.msra.mxu0 %v894
    %896 = vmatprep.subr.mxu0 0.0
    %v897 = vand.u32 %v598, 4294901760
    %v898 = vsub.f32 %v598, %v897
    %899 = vmatpush1.msra.mxu0 %v898
    %900 = vmatprep.subr.mxu0 0.0
    %v901 = vand.u32 %v597, 4294901760
    %v902 = vsub.f32 %v597, %v901
    %903 = vmatpush1.msra.mxu0 %v902
    %904 = vmatprep.subr.mxu0 0.0
    %v905 = vand.u32 %v596, 4294901760
    %v906 = vsub.f32 %v596, %v905
    %907 = vmatpush1.msra.mxu0 %v906
    %908 = vmatprep.subr.mxu0 0.0
    %v909 = vand.u32 %v595, 4294901760
    %v910 = vsub.f32 %v595, %v909
    %911 = vmatpush1.msra.mxu0 %v910
    %912 = vmatprep.subr.mxu0 0.0
    %v913 = vand.u32 %v594, 4294901760
    %v914 = vsub.f32 %v594, %v913
    %915 = vmatpush1.msra.mxu0 %v914
    %916 = vmatprep.subr.mxu0 0.0
    %v917 = vand.u32 %v593, 4294901760
    %v918 = vsub.f32 %v593, %v917
    %919 = vmatpush1.msra.mxu0 %v918
    %920 = vmatprep.subr.mxu0 0.0
    %v921 = vand.u32 %v592, 4294901760
    %v922 = vsub.f32 %v592, %v921
    %923 = vmatpush1.msra.mxu0 %v922
    %924 = vmatprep.subr.mxu0 0.0
    %v925 = vand.u32 %v591, 4294901760
    %v926 = vsub.f32 %v591, %v925
    %927 = vmatpush1.msra.mxu0 %v926
    %928 = vmatprep.subr.mxu0 0.0
    %v929 = vand.u32 %v590, 4294901760
    %v930 = vsub.f32 %v590, %v929
    %931 = vmatpush1.msra.mxu0 %v930
    %932 = vmatprep.subr.mxu0 0.0
    %933 = vmatpush2.msra.mxu0 0.0
    %934 = vmatprep.subr.mxu0 0.0
    %935 = vmatpush2.msra.mxu0 0.0
    %936 = vmatprep.subr.mxu0 0.0
    %937 = vmatpush2.msra.mxu0 0.0
    %938 = vmatprep.subr.mxu0 0.0
    %939 = vmatpush2.msra.mxu0 0.0
    %940 = vmatprep.subr.mxu0 0.0
    %941 = vmatpush2.msra.mxu0 0.0
    %942 = vmatprep.subr.mxu0 0.0
    %943 = vmatpush2.msra.mxu0 0.0
    %944 = vmatprep.subr.mxu0 0.0
    %945 = vmatpush2.msra.mxu0 0.0
    %946 = vmatprep.subr.mxu0 0.0
    %947 = vmatpush2.msra.mxu0 0.0
    %948 = vmatprep.subr.mxu0 0.0
    %949 = vmatpush2.msra.mxu0 0.0
    %950 = vmatprep.subr.mxu0 0.0
    %951 = vmatpush2.msra.mxu0 0.0
    %952 = vmatprep.subr.mxu0 0.0
    %953 = vmatpush2.msra.mxu0 0.0
    %954 = vmatprep.subr.mxu0 0.0
    %955 = vmatpush2.msra.mxu0 0.0
    %956 = vmatprep.subr.mxu0 0.0
    %957 = vmatpush2.msra.mxu0 0.0
    %958 = vmatprep.subr.mxu0 0.0
    %959 = vmatpush2.msra.mxu0 0.0
    %960 = vmatprep.subr.mxu0 0.0
    %961 = vmatpush2.msra.mxu0 0.0
    %962 = vmatprep.subr.mxu0 0.0
    %963 = vmatpush2.msra.mxu0 0.0
    %964 = vmatprep.mubr.f32.mxu0 0.0
    %v965 = vand.u32 %v588, 4294901760
    %v966 = vsub.f32 %v588, %v965
    %967 = vmatmul.mubr.f32.gmra.mxu0 %v966
    %v968 = vpop.f32.mrf.mxu0
    %v969 = vadd.f32 %v859, %v968
    %v970 = vpop.f32.mrf.mxu0
    %971 = vmatprep.mubr.f32.mxu0 0.0
    %v972 = vand.u32 %v589, 4294901760
    %v973 = vsub.f32 %v589, %v972
    %974 = vmatmul.mubr.f32.gmra.mxu0 %v973
    %v975 = vpop.f32.mrf.mxu0
    %v976 = vadd.f32 %v865, %v975
    %v977 = vpop.f32.mrf.mxu0
    %978 = vdwg.mxu0
    %979 = vmatprep.subr.mxu0 0.0
    %v980 = vand.u32 %v605, 4294901760
    %981 = vmatpush1.msra.mxu0 %v980
    %982 = vmatprep.subr.mxu0 0.0
    %v983 = vand.u32 %v604, 4294901760
    %984 = vmatpush1.msra.mxu0 %v983
    %985 = vmatprep.subr.mxu0 0.0
    %v986 = vand.u32 %v603, 4294901760
    %987 = vmatpush1.msra.mxu0 %v986
    %988 = vmatprep.subr.mxu0 0.0
    %v989 = vand.u32 %v602, 4294901760
    %990 = vmatpush1.msra.mxu0 %v989
    %991 = vmatprep.subr.mxu0 0.0
    %v992 = vand.u32 %v601, 4294901760
    %993 = vmatpush1.msra.mxu0 %v992
    %994 = vmatprep.subr.mxu0 0.0
    %v995 = vand.u32 %v600, 4294901760
    %996 = vmatpush1.msra.mxu0 %v995
    %997 = vmatprep.subr.mxu0 0.0
    %v998 = vand.u32 %v599, 4294901760
    %999 = vmatpush1.msra.mxu0 %v998
    %1000 = vmatprep.subr.mxu0 0.0
    %v1001 = vand.u32 %v598, 4294901760
    %1002 = vmatpush1.msra.mxu0 %v1001
    %1003 = vmatprep.subr.mxu0 0.0
    %v1004 = vand.u32 %v597, 4294901760
    %1005 = vmatpush1.msra.mxu0 %v1004
    %1006 = vmatprep.subr.mxu0 0.0
    %v1007 = vand.u32 %v596, 4294901760
    %1008 = vmatpush1.msra.mxu0 %v1007
    %1009 = vmatprep.subr.mxu0 0.0
    %v1010 = vand.u32 %v595, 4294901760
    %1011 = vmatpush1.msra.mxu0 %v1010
    %1012 = vmatprep.subr.mxu0 0.0
    %v1013 = vand.u32 %v594, 4294901760
    %1014 = vmatpush1.msra.mxu0 %v1013
    %1015 = vmatprep.subr.mxu0 0.0
    %v1016 = vand.u32 %v593, 4294901760
    %1017 = vmatpush1.msra.mxu0 %v1016
    %1018 = vmatprep.subr.mxu0 0.0
    %v1019 = vand.u32 %v592, 4294901760
    %1020 = vmatpush1.msra.mxu0 %v1019
    %1021 = vmatprep.subr.mxu0 0.0
    %v1022 = vand.u32 %v591, 4294901760
    %1023 = vmatpush1.msra.mxu0 %v1022
    %1024 = vmatprep.subr.mxu0 0.0
    %v1025 = vand.u32 %v590, 4294901760
    %1026 = vmatpush1.msra.mxu0 %v1025
    %1027 = vmatprep.subr.mxu0 0.0
    %1028 = vmatpush2.msra.mxu0 0.0
    %1029 = vmatprep.subr.mxu0 0.0
    %1030 = vmatpush2.msra.mxu0 0.0
    %1031 = vmatprep.subr.mxu0 0.0
    %1032 = vmatpush2.msra.mxu0 0.0
    %1033 = vmatprep.subr.mxu0 0.0
    %1034 = vmatpush2.msra.mxu0 0.0
    %1035 = vmatprep.subr.mxu0 0.0
    %1036 = vmatpush2.msra.mxu0 0.0
    %1037 = vmatprep.subr.mxu0 0.0
    %1038 = vmatpush2.msra.mxu0 0.0
    %1039 = vmatprep.subr.mxu0 0.0
    %1040 = vmatpush2.msra.mxu0 0.0
    %1041 = vmatprep.subr.mxu0 0.0
    %1042 = vmatpush2.msra.mxu0 0.0
    %1043 = vmatprep.subr.mxu0 0.0
    %1044 = vmatpush2.msra.mxu0 0.0
    %1045 = vmatprep.subr.mxu0 0.0
    %1046 = vmatpush2.msra.mxu0 0.0
    %1047 = vmatprep.subr.mxu0 0.0
    %1048 = vmatpush2.msra.mxu0 0.0
    %1049 = vmatprep.subr.mxu0 0.0
    %1050 = vmatpush2.msra.mxu0 0.0
    %1051 = vmatprep.subr.mxu0 0.0
    %1052 = vmatpush2.msra.mxu0 0.0
    %1053 = vmatprep.subr.mxu0 0.0
    %1054 = vmatpush2.msra.mxu0 0.0
    %1055 = vmatprep.subr.mxu0 0.0
    %1056 = vmatpush2.msra.mxu0 0.0
    %1057 = vmatprep.subr.mxu0 0.0
    %1058 = vmatpush2.msra.mxu0 0.0
    %1059 = vmatprep.mubr.f32.mxu0 0.0
    %v1060 = vand.u32 %v588, 4294901760
    %v1061 = vsub.f32 %v588, %v1060
    %v1062 = vand.u32 %v1061, 4294901760
    %1063 = vmatmul.mubr.f32.gmra.mxu0 %v1062
    %v1064 = vpop.f32.mrf.mxu0
    %v1065 = vadd.f32 %v969, %v1064
    %v1066 = vpop.f32.mrf.mxu0
    %1067 = vmatprep.mubr.f32.mxu0 0.0
    %v1068 = vand.u32 %v589, 4294901760
    %v1069 = vsub.f32 %v589, %v1068
    %v1070 = vand.u32 %v1069, 4294901760
    %1071 = vmatmul.mubr.f32.gmra.mxu0 %v1070
    %v1072 = vpop.f32.mrf.mxu0
    %v1073 = vadd.f32 %v976, %v1072
    %v1074 = vpop.f32.mrf.mxu0
    %1075 = vdwg.mxu0
    %1076 = vmatprep.subr.mxu0 0.0
    %v1077 = vand.u32 %v605, 4294901760
    %v1078 = vsub.f32 %v605, %v1077
    %v1079 = vand.u32 %v1078, 4294901760
    %1080 = vmatpush1.msra.mxu0 %v1079
    %1081 = vmatprep.subr.mxu0 0.0
    %v1082 = vand.u32 %v604, 4294901760
    %v1083 = vsub.f32 %v604, %v1082
    %v1084 = vand.u32 %v1083, 4294901760
    %1085 = vmatpush1.msra.mxu0 %v1084
    %1086 = vmatprep.subr.mxu0 0.0
    %v1087 = vand.u32 %v603, 4294901760
    %v1088 = vsub.f32 %v603, %v1087
    %v1089 = vand.u32 %v1088, 4294901760
    %1090 = vmatpush1.msra.mxu0 %v1089
    %1091 = vmatprep.subr.mxu0 0.0
    %v1092 = vand.u32 %v602, 4294901760
    %v1093 = vsub.f32 %v602, %v1092
    %v1094 = vand.u32 %v1093, 4294901760
    %1095 = vmatpush1.msra.mxu0 %v1094
    %1096 = vmatprep.subr.mxu0 0.0
    %v1097 = vand.u32 %v601, 4294901760
    %v1098 = vsub.f32 %v601, %v1097
    %v1099 = vand.u32 %v1098, 4294901760
    %1100 = vmatpush1.msra.mxu0 %v1099
    %1101 = vmatprep.subr.mxu0 0.0
    %v1102 = vand.u32 %v600, 4294901760
    %v1103 = vsub.f32 %v600, %v1102
    %v1104 = vand.u32 %v1103, 4294901760
    %1105 = vmatpush1.msra.mxu0 %v1104
    %1106 = vmatprep.subr.mxu0 0.0
    %v1107 = vand.u32 %v599, 4294901760
    %v1108 = vsub.f32 %v599, %v1107
    %v1109 = vand.u32 %v1108, 4294901760
    %1110 = vmatpush1.msra.mxu0 %v1109
    %1111 = vmatprep.subr.mxu0 0.0
    %v1112 = vand.u32 %v598, 4294901760
    %v1113 = vsub.f32 %v598, %v1112
    %v1114 = vand.u32 %v1113, 4294901760
    %1115 = vmatpush1.msra.mxu0 %v1114
    %1116 = vmatprep.subr.mxu0 0.0
    %v1117 = vand.u32 %v597, 4294901760
    %v1118 = vsub.f32 %v597, %v1117
    %v1119 = vand.u32 %v1118, 4294901760
    %1120 = vmatpush1.msra.mxu0 %v1119
    %1121 = vmatprep.subr.mxu0 0.0
    %v1122 = vand.u32 %v596, 4294901760
    %v1123 = vsub.f32 %v596, %v1122
    %v1124 = vand.u32 %v1123, 4294901760
    %1125 = vmatpush1.msra.mxu0 %v1124
    %1126 = vmatprep.subr.mxu0 0.0
    %v1127 = vand.u32 %v595, 4294901760
    %v1128 = vsub.f32 %v595, %v1127
    %v1129 = vand.u32 %v1128, 4294901760
    %1130 = vmatpush1.msra.mxu0 %v1129
    %1131 = vmatprep.subr.mxu0 0.0
    %v1132 = vand.u32 %v594, 4294901760
    %v1133 = vsub.f32 %v594, %v1132
    %v1134 = vand.u32 %v1133, 4294901760
    %1135 = vmatpush1.msra.mxu0 %v1134
    %1136 = vmatprep.subr.mxu0 0.0
    %v1137 = vand.u32 %v593, 4294901760
    %v1138 = vsub.f32 %v593, %v1137
    %v1139 = vand.u32 %v1138, 4294901760
    %1140 = vmatpush1.msra.mxu0 %v1139
    %1141 = vmatprep.subr.mxu0 0.0
    %v1142 = vand.u32 %v592, 4294901760
    %v1143 = vsub.f32 %v592, %v1142
    %v1144 = vand.u32 %v1143, 4294901760
    %1145 = vmatpush1.msra.mxu0 %v1144
    %1146 = vmatprep.subr.mxu0 0.0
    %v1147 = vand.u32 %v591, 4294901760
    %v1148 = vsub.f32 %v591, %v1147
    %v1149 = vand.u32 %v1148, 4294901760
    %1150 = vmatpush1.msra.mxu0 %v1149
    %1151 = vmatprep.subr.mxu0 0.0
    %v1152 = vand.u32 %v590, 4294901760
    %v1153 = vsub.f32 %v590, %v1152
    %v1154 = vand.u32 %v1153, 4294901760
    %1155 = vmatpush1.msra.mxu0 %v1154
    %1156 = vmatprep.subr.mxu0 0.0
    %1157 = vmatpush2.msra.mxu0 0.0
    %1158 = vmatprep.subr.mxu0 0.0
    %1159 = vmatpush2.msra.mxu0 0.0
    %1160 = vmatprep.subr.mxu0 0.0
    %1161 = vmatpush2.msra.mxu0 0.0
    %1162 = vmatprep.subr.mxu0 0.0
    %1163 = vmatpush2.msra.mxu0 0.0
    %1164 = vmatprep.subr.mxu0 0.0
    %1165 = vmatpush2.msra.mxu0 0.0
    %1166 = vmatprep.subr.mxu0 0.0
    %1167 = vmatpush2.msra.mxu0 0.0
    %1168 = vmatprep.subr.mxu0 0.0
    %1169 = vmatpush2.msra.mxu0 0.0
    %1170 = vmatprep.subr.mxu0 0.0
    %1171 = vmatpush2.msra.mxu0 0.0
    %1172 = vmatprep.subr.mxu0 0.0
    %1173 = vmatpush2.msra.mxu0 0.0
    %1174 = vmatprep.subr.mxu0 0.0
    %1175 = vmatpush2.msra.mxu0 0.0
    %1176 = vmatprep.subr.mxu0 0.0
    %1177 = vmatpush2.msra.mxu0 0.0
    %1178 = vmatprep.subr.mxu0 0.0
    %1179 = vmatpush2.msra.mxu0 0.0
    %1180 = vmatprep.subr.mxu0 0.0
    %1181 = vmatpush2.msra.mxu0 0.0
    %1182 = vmatprep.subr.mxu0 0.0
    %1183 = vmatpush2.msra.mxu0 0.0
    %1184 = vmatprep.subr.mxu0 0.0
    %1185 = vmatpush2.msra.mxu0 0.0
    %1186 = vmatprep.subr.mxu0 0.0
    %1187 = vmatpush2.msra.mxu0 0.0
    %1188 = vmatprep.mubr.f32.mxu0 0.0
    %v1189 = vand.u32 %v588, 4294901760
    %1190 = vmatmul.mubr.f32.gmra.mxu0 %v1189
    %v1191 = vpop.f32.mrf.mxu0
    %v1192 = vadd.f32 %v1065, %v1191
    %v1193 = vpop.f32.mrf.mxu0
    %1194 = vmatprep.mubr.f32.mxu0 0.0
    %v1195 = vand.u32 %v589, 4294901760
    %1196 = vmatmul.mubr.f32.gmra.mxu0 %v1195
    %v1197 = vpop.f32.mrf.mxu0
    %v1198 = vadd.f32 %v1073, %v1197
    %v1199 = vpop.f32.mrf.mxu0
    %1200 = vdwg.mxu0
    %1201 = vmatprep.subr.mxu0 0.0
    %v1202 = vand.u32 %v605, 4294901760
    %1203 = vmatpush1.msra.mxu0 %v1202
    %1204 = vmatprep.subr.mxu0 0.0
    %v1205 = vand.u32 %v604, 4294901760
    %1206 = vmatpush1.msra.mxu0 %v1205
    %1207 = vmatprep.subr.mxu0 0.0
    %v1208 = vand.u32 %v603, 4294901760
    %1209 = vmatpush1.msra.mxu0 %v1208
    %1210 = vmatprep.subr.mxu0 0.0
    %v1211 = vand.u32 %v602, 4294901760
    %1212 = vmatpush1.msra.mxu0 %v1211
    %1213 = vmatprep.subr.mxu0 0.0
    %v1214 = vand.u32 %v601, 4294901760
    %1215 = vmatpush1.msra.mxu0 %v1214
    %1216 = vmatprep.subr.mxu0 0.0
    %v1217 = vand.u32 %v600, 4294901760
    %1218 = vmatpush1.msra.mxu0 %v1217
    %1219 = vmatprep.subr.mxu0 0.0
    %v1220 = vand.u32 %v599, 4294901760
    %1221 = vmatpush1.msra.mxu0 %v1220
    %1222 = vmatprep.subr.mxu0 0.0
    %v1223 = vand.u32 %v598, 4294901760
    %1224 = vmatpush1.msra.mxu0 %v1223
    %1225 = vmatprep.subr.mxu0 0.0
    %v1226 = vand.u32 %v597, 4294901760
    %1227 = vmatpush1.msra.mxu0 %v1226
    %1228 = vmatprep.subr.mxu0 0.0
    %v1229 = vand.u32 %v596, 4294901760
    %1230 = vmatpush1.msra.mxu0 %v1229
    %1231 = vmatprep.subr.mxu0 0.0
    %v1232 = vand.u32 %v595, 4294901760
    %1233 = vmatpush1.msra.mxu0 %v1232
    %1234 = vmatprep.subr.mxu0 0.0
    %v1235 = vand.u32 %v594, 4294901760
    %1236 = vmatpush1.msra.mxu0 %v1235
    %1237 = vmatprep.subr.mxu0 0.0
    %v1238 = vand.u32 %v593, 4294901760
    %1239 = vmatpush1.msra.mxu0 %v1238
    %1240 = vmatprep.subr.mxu0 0.0
    %v1241 = vand.u32 %v592, 4294901760
    %1242 = vmatpush1.msra.mxu0 %v1241
    %1243 = vmatprep.subr.mxu0 0.0
    %v1244 = vand.u32 %v591, 4294901760
    %1245 = vmatpush1.msra.mxu0 %v1244
    %1246 = vmatprep.subr.mxu0 0.0
    %v1247 = vand.u32 %v590, 4294901760
    %1248 = vmatpush1.msra.mxu0 %v1247
    %1249 = vmatprep.subr.mxu0 0.0
    %1250 = vmatpush2.msra.mxu0 0.0
    %1251 = vmatprep.subr.mxu0 0.0
    %1252 = vmatpush2.msra.mxu0 0.0
    %1253 = vmatprep.subr.mxu0 0.0
    %1254 = vmatpush2.msra.mxu0 0.0
    %1255 = vmatprep.subr.mxu0 0.0
    %1256 = vmatpush2.msra.mxu0 0.0
    %1257 = vmatprep.subr.mxu0 0.0
    %1258 = vmatpush2.msra.mxu0 0.0
    %1259 = vmatprep.subr.mxu0 0.0
    %1260 = vmatpush2.msra.mxu0 0.0
    %1261 = vmatprep.subr.mxu0 0.0
    %1262 = vmatpush2.msra.mxu0 0.0
    %1263 = vmatprep.subr.mxu0 0.0
    %1264 = vmatpush2.msra.mxu0 0.0
    %1265 = vmatprep.subr.mxu0 0.0
    %1266 = vmatpush2.msra.mxu0 0.0
    %1267 = vmatprep.subr.mxu0 0.0
    %1268 = vmatpush2.msra.mxu0 0.0
    %1269 = vmatprep.subr.mxu0 0.0
    %1270 = vmatpush2.msra.mxu0 0.0
    %1271 = vmatprep.subr.mxu0 0.0
    %1272 = vmatpush2.msra.mxu0 0.0
    %1273 = vmatprep.subr.mxu0 0.0
    %1274 = vmatpush2.msra.mxu0 0.0
    %1275 = vmatprep.subr.mxu0 0.0
    %1276 = vmatpush2.msra.mxu0 0.0
    %1277 = vmatprep.subr.mxu0 0.0
    %1278 = vmatpush2.msra.mxu0 0.0
    %1279 = vmatprep.subr.mxu0 0.0
    %1280 = vmatpush2.msra.mxu0 0.0
    %1281 = vmatprep.mubr.f32.mxu0 0.0
    %v1282 = vand.u32 %v588, 4294901760
    %1283 = vmatmul.mubr.f32.gmra.mxu0 %v1282
    %v1284 = vpop.f32.mrf.mxu0
    %v1285 = vadd.f32 %v1192, %v1284
    %v1286 = vpop.f32.mrf.mxu0
    %1287 = vmatprep.mubr.f32.mxu0 0.0
    %v1288 = vand.u32 %v589, 4294901760
    %1289 = vmatmul.mubr.f32.gmra.mxu0 %v1288
    %v1290 = vpop.f32.mrf.mxu0
    %v1291 = vadd.f32 %v1198, %v1290
    %v1292 = vpop.f32.mrf.mxu0
    %1293 = vdwg.mxu0
    %vm1294 = vcmp.gt.f32.partialorder %v1285, 0.0
    %vm1295 = vcmp.gt.f32.partialorder %v1291, 0.0
    %v1296 = vmul.f32 %v1285, 0.01
    %v1297 = vmul.f32 %v1291, 0.01
    %v1298 = vsel %vm1294, %v1285, %v1296
    %v1299 = vsel %vm1295, %v1291, %v1297
    %s1300 = scalar_lea.vmem [#allocation2], 128
    %v1301 = vld [vmem:[%s1300] sm:$0xff]
    %v1302 = vld [vmem:[%s1300 + $0x8] sm:$0xff]
    %v1303 = vld [vmem:[%s1300 + $0x10] sm:$0xff]
    %v1304 = vld [vmem:[%s1300 + $0x18] sm:$0xff]
    %v1305 = vld [vmem:[%s1300 + $0x20] sm:$0xff]
    %v1306 = vld [vmem:[%s1300 + $0x28] sm:$0xff]
    %v1307 = vld [vmem:[%s1300 + $0x30] sm:$0xff]
    %v1308 = vld [vmem:[%s1300 + $0x38] sm:$0xff]
    %v1309 = vld [vmem:[%s1300 + $0x40] sm:$0xff]
    %v1310 = vld [vmem:[%s1300 + $0x48] sm:$0xff]
    %v1311 = vld [vmem:[%s1300 + $0x50] sm:$0xff]
    %v1312 = vld [vmem:[%s1300 + $0x58] sm:$0xff]
    %v1313 = vld [vmem:[%s1300 + $0x60] sm:$0xff]
    %v1314 = vld [vmem:[%s1300 + $0x68] sm:$0xff]
    %v1315 = vld [vmem:[%s1300 + $0x70] sm:$0xff]
    %v1316 = vld [vmem:[%s1300 + $0x78] sm:$0xff]
    %v1317 = vlaneseq
    %v1318 = vshrl.u32 %v1317, 7
    %v1319 = vsub.s32 2, %v1318
    %v1320 = vrot.slane %v40, %v1319
    %1321 = vmatprep.subr.mxu0 0.0
    %v1322 = vand.u32 %v1316, 4294901760
    %1323 = vmatpush1.msra.mxu0 %v1322
    %1324 = vmatprep.subr.mxu0 0.0
    %v1325 = vand.u32 %v1315, 4294901760
    %1326 = vmatpush1.msra.mxu0 %v1325
    %1327 = vmatprep.subr.mxu0 0.0
    %v1328 = vand.u32 %v1314, 4294901760
    %1329 = vmatpush1.msra.mxu0 %v1328
    %1330 = vmatprep.subr.mxu0 0.0
    %v1331 = vand.u32 %v1313, 4294901760
    %1332 = vmatpush1.msra.mxu0 %v1331
    %1333 = vmatprep.subr.mxu0 0.0
    %v1334 = vand.u32 %v1312, 4294901760
    %1335 = vmatpush1.msra.mxu0 %v1334
    %1336 = vmatprep.subr.mxu0 0.0
    %v1337 = vand.u32 %v1311, 4294901760
    %1338 = vmatpush1.msra.mxu0 %v1337
    %1339 = vmatprep.subr.mxu0 0.0
    %v1340 = vand.u32 %v1310, 4294901760
    %1341 = vmatpush1.msra.mxu0 %v1340
    %1342 = vmatprep.subr.mxu0 0.0
    %v1343 = vand.u32 %v1309, 4294901760
    %1344 = vmatpush1.msra.mxu0 %v1343
    %1345 = vmatprep.subr.mxu0 0.0
    %v1346 = vand.u32 %v1308, 4294901760
    %1347 = vmatpush1.msra.mxu0 %v1346
    %1348 = vmatprep.subr.mxu0 0.0
    %v1349 = vand.u32 %v1307, 4294901760
    %1350 = vmatpush1.msra.mxu0 %v1349
    %1351 = vmatprep.subr.mxu0 0.0
    %v1352 = vand.u32 %v1306, 4294901760
    %1353 = vmatpush1.msra.mxu0 %v1352
    %1354 = vmatprep.subr.mxu0 0.0
    %v1355 = vand.u32 %v1305, 4294901760
    %1356 = vmatpush1.msra.mxu0 %v1355
    %1357 = vmatprep.subr.mxu0 0.0
    %v1358 = vand.u32 %v1304, 4294901760
    %1359 = vmatpush1.msra.mxu0 %v1358
    %1360 = vmatprep.subr.mxu0 0.0
    %v1361 = vand.u32 %v1303, 4294901760
    %1362 = vmatpush1.msra.mxu0 %v1361
    %1363 = vmatprep.subr.mxu0 0.0
    %v1364 = vand.u32 %v1302, 4294901760
    %1365 = vmatpush1.msra.mxu0 %v1364
    %1366 = vmatprep.subr.mxu0 0.0
    %v1367 = vand.u32 %v1301, 4294901760
    %1368 = vmatpush1.msra.mxu0 %v1367
    %1369 = vmatprep.subr.mxu0 0.0
    %1370 = vmatpush2.msra.mxu0 0.0
    %1371 = vmatprep.subr.mxu0 0.0
    %1372 = vmatpush2.msra.mxu0 0.0
    %1373 = vmatprep.subr.mxu0 0.0
    %1374 = vmatpush2.msra.mxu0 0.0
    %1375 = vmatprep.subr.mxu0 0.0
    %1376 = vmatpush2.msra.mxu0 0.0
    %1377 = vmatprep.subr.mxu0 0.0
    %1378 = vmatpush2.msra.mxu0 0.0
    %1379 = vmatprep.subr.mxu0 0.0
    %1380 = vmatpush2.msra.mxu0 0.0
    %1381 = vmatprep.subr.mxu0 0.0
    %1382 = vmatpush2.msra.mxu0 0.0
    %1383 = vmatprep.subr.mxu0 0.0
    %1384 = vmatpush2.msra.mxu0 0.0
    %1385 = vmatprep.subr.mxu0 0.0
    %1386 = vmatpush2.msra.mxu0 0.0
    %1387 = vmatprep.subr.mxu0 0.0
    %1388 = vmatpush2.msra.mxu0 0.0
    %1389 = vmatprep.subr.mxu0 0.0
    %1390 = vmatpush2.msra.mxu0 0.0
    %1391 = vmatprep.subr.mxu0 0.0
    %1392 = vmatpush2.msra.mxu0 0.0
    %1393 = vmatprep.subr.mxu0 0.0
    %1394 = vmatpush2.msra.mxu0 0.0
    %1395 = vmatprep.subr.mxu0 0.0
    %1396 = vmatpush2.msra.mxu0 0.0
    %1397 = vmatprep.subr.mxu0 0.0
    %1398 = vmatpush2.msra.mxu0 0.0
    %1399 = vmatprep.subr.mxu0 0.0
    %1400 = vmatpush2.msra.mxu0 0.0
    %1401 = vmatprep.mubr.f32.mxu0 0.0
    %v1402 = vand.u32 %v1298, 4294901760
    %v1403 = vsub.f32 %v1298, %v1402
    %v1404 = vand.u32 %v1403, 4294901760
    %v1405 = vsub.f32 %v1403, %v1404
    %v1406 = vand.u32 %v1405, 4294901760
    %1407 = vmatmul.mubr.f32.gmra.mxu0 %v1406
    %v1408 = vpop.f32.mrf.mxu0
    %v1409 = vadd.f32 %v1320, %v1408
    %v1410 = vpop.f32.mrf.mxu0
    %1411 = vmatprep.mubr.f32.mxu0 0.0
    %v1412 = vand.u32 %v1299, 4294901760
    %v1413 = vsub.f32 %v1299, %v1412
    %v1414 = vand.u32 %v1413, 4294901760
    %v1415 = vsub.f32 %v1413, %v1414
    %v1416 = vand.u32 %v1415, 4294901760
    %1417 = vmatmul.mubr.f32.gmra.mxu0 %v1416
    %v1418 = vpop.f32.mrf.mxu0
    %v1419 = vadd.f32 %v1320, %v1418
    %v1420 = vpop.f32.mrf.mxu0
    %1421 = vdwg.mxu0
    %1422 = vmatprep.subr.mxu0 0.0
    %v1423 = vand.u32 %v1316, 4294901760
    %v1424 = vsub.f32 %v1316, %v1423
    %v1425 = vand.u32 %v1424, 4294901760
    %v1426 = vsub.f32 %v1424, %v1425
    %v1427 = vand.u32 %v1426, 4294901760
    %1428 = vmatpush1.msra.mxu0 %v1427
    %1429 = vmatprep.subr.mxu0 0.0
    %v1430 = vand.u32 %v1315, 4294901760
    %v1431 = vsub.f32 %v1315, %v1430
    %v1432 = vand.u32 %v1431, 4294901760
    %v1433 = vsub.f32 %v1431, %v1432
    %v1434 = vand.u32 %v1433, 4294901760
    %1435 = vmatpush1.msra.mxu0 %v1434
    %1436 = vmatprep.subr.mxu0 0.0
    %v1437 = vand.u32 %v1314, 4294901760
    %v1438 = vsub.f32 %v1314, %v1437
    %v1439 = vand.u32 %v1438, 4294901760
    %v1440 = vsub.f32 %v1438, %v1439
    %v1441 = vand.u32 %v1440, 4294901760
    %1442 = vmatpush1.msra.mxu0 %v1441
    %1443 = vmatprep.subr.mxu0 0.0
    %v1444 = vand.u32 %v1313, 4294901760
    %v1445 = vsub.f32 %v1313, %v1444
    %v1446 = vand.u32 %v1445, 4294901760
    %v1447 = vsub.f32 %v1445, %v1446
    %v1448 = vand.u32 %v1447, 4294901760
    %1449 = vmatpush1.msra.mxu0 %v1448
    %1450 = vmatprep.subr.mxu0 0.0
    %v1451 = vand.u32 %v1312, 4294901760
    %v1452 = vsub.f32 %v1312, %v1451
    %v1453 = vand.u32 %v1452, 4294901760
    %v1454 = vsub.f32 %v1452, %v1453
    %v1455 = vand.u32 %v1454, 4294901760
    %1456 = vmatpush1.msra.mxu0 %v1455
    %1457 = vmatprep.subr.mxu0 0.0
    %v1458 = vand.u32 %v1311, 4294901760
    %v1459 = vsub.f32 %v1311, %v1458
    %v1460 = vand.u32 %v1459, 4294901760
    %v1461 = vsub.f32 %v1459, %v1460
    %v1462 = vand.u32 %v1461, 4294901760
    %1463 = vmatpush1.msra.mxu0 %v1462
    %1464 = vmatprep.subr.mxu0 0.0
    %v1465 = vand.u32 %v1310, 4294901760
    %v1466 = vsub.f32 %v1310, %v1465
    %v1467 = vand.u32 %v1466, 4294901760
    %v1468 = vsub.f32 %v1466, %v1467
    %v1469 = vand.u32 %v1468, 4294901760
    %1470 = vmatpush1.msra.mxu0 %v1469
    %1471 = vmatprep.subr.mxu0 0.0
    %v1472 = vand.u32 %v1309, 4294901760
    %v1473 = vsub.f32 %v1309, %v1472
    %v1474 = vand.u32 %v1473, 4294901760
    %v1475 = vsub.f32 %v1473, %v1474
    %v1476 = vand.u32 %v1475, 4294901760
    %1477 = vmatpush1.msra.mxu0 %v1476
    %1478 = vmatprep.subr.mxu0 0.0
    %v1479 = vand.u32 %v1308, 4294901760
    %v1480 = vsub.f32 %v1308, %v1479
    %v1481 = vand.u32 %v1480, 4294901760
    %v1482 = vsub.f32 %v1480, %v1481
    %v1483 = vand.u32 %v1482, 4294901760
    %1484 = vmatpush1.msra.mxu0 %v1483
    %1485 = vmatprep.subr.mxu0 0.0
    %v1486 = vand.u32 %v1307, 4294901760
    %v1487 = vsub.f32 %v1307, %v1486
    %v1488 = vand.u32 %v1487, 4294901760
    %v1489 = vsub.f32 %v1487, %v1488
    %v1490 = vand.u32 %v1489, 4294901760
    %1491 = vmatpush1.msra.mxu0 %v1490
    %1492 = vmatprep.subr.mxu0 0.0
    %v1493 = vand.u32 %v1306, 4294901760
    %v1494 = vsub.f32 %v1306, %v1493
    %v1495 = vand.u32 %v1494, 4294901760
    %v1496 = vsub.f32 %v1494, %v1495
    %v1497 = vand.u32 %v1496, 4294901760
    %1498 = vmatpush1.msra.mxu0 %v1497
    %1499 = vmatprep.subr.mxu0 0.0
    %v1500 = vand.u32 %v1305, 4294901760
    %v1501 = vsub.f32 %v1305, %v1500
    %v1502 = vand.u32 %v1501, 4294901760
    %v1503 = vsub.f32 %v1501, %v1502
    %v1504 = vand.u32 %v1503, 4294901760
    %1505 = vmatpush1.msra.mxu0 %v1504
    %1506 = vmatprep.subr.mxu0 0.0
    %v1507 = vand.u32 %v1304, 4294901760
    %v1508 = vsub.f32 %v1304, %v1507
    %v1509 = vand.u32 %v1508, 4294901760
    %v1510 = vsub.f32 %v1508, %v1509
    %v1511 = vand.u32 %v1510, 4294901760
    %1512 = vmatpush1.msra.mxu0 %v1511
    %1513 = vmatprep.subr.mxu0 0.0
    %v1514 = vand.u32 %v1303, 4294901760
    %v1515 = vsub.f32 %v1303, %v1514
    %v1516 = vand.u32 %v1515, 4294901760
    %v1517 = vsub.f32 %v1515, %v1516
    %v1518 = vand.u32 %v1517, 4294901760
    %1519 = vmatpush1.msra.mxu0 %v1518
    %1520 = vmatprep.subr.mxu0 0.0
    %v1521 = vand.u32 %v1302, 4294901760
    %v1522 = vsub.f32 %v1302, %v1521
    %v1523 = vand.u32 %v1522, 4294901760
    %v1524 = vsub.f32 %v1522, %v1523
    %v1525 = vand.u32 %v1524, 4294901760
    %1526 = vmatpush1.msra.mxu0 %v1525
    %1527 = vmatprep.subr.mxu0 0.0
    %v1528 = vand.u32 %v1301, 4294901760
    %v1529 = vsub.f32 %v1301, %v1528
    %v1530 = vand.u32 %v1529, 4294901760
    %v1531 = vsub.f32 %v1529, %v1530
    %v1532 = vand.u32 %v1531, 4294901760
    %1533 = vmatpush1.msra.mxu0 %v1532
    %1534 = vmatprep.subr.mxu0 0.0
    %1535 = vmatpush2.msra.mxu0 0.0
    %1536 = vmatprep.subr.mxu0 0.0
    %1537 = vmatpush2.msra.mxu0 0.0
    %1538 = vmatprep.subr.mxu0 0.0
    %1539 = vmatpush2.msra.mxu0 0.0
    %1540 = vmatprep.subr.mxu0 0.0
    %1541 = vmatpush2.msra.mxu0 0.0
    %1542 = vmatprep.subr.mxu0 0.0
    %1543 = vmatpush2.msra.mxu0 0.0
    %1544 = vmatprep.subr.mxu0 0.0
    %1545 = vmatpush2.msra.mxu0 0.0
    %1546 = vmatprep.subr.mxu0 0.0
    %1547 = vmatpush2.msra.mxu0 0.0
    %1548 = vmatprep.subr.mxu0 0.0
    %1549 = vmatpush2.msra.mxu0 0.0
    %1550 = vmatprep.subr.mxu0 0.0
    %1551 = vmatpush2.msra.mxu0 0.0
    %1552 = vmatprep.subr.mxu0 0.0
    %1553 = vmatpush2.msra.mxu0 0.0
    %1554 = vmatprep.subr.mxu0 0.0
    %1555 = vmatpush2.msra.mxu0 0.0
    %1556 = vmatprep.subr.mxu0 0.0
    %1557 = vmatpush2.msra.mxu0 0.0
    %1558 = vmatprep.subr.mxu0 0.0
    %1559 = vmatpush2.msra.mxu0 0.0
    %1560 = vmatprep.subr.mxu0 0.0
    %1561 = vmatpush2.msra.mxu0 0.0
    %1562 = vmatprep.subr.mxu0 0.0
    %1563 = vmatpush2.msra.mxu0 0.0
    %1564 = vmatprep.subr.mxu0 0.0
    %1565 = vmatpush2.msra.mxu0 0.0
    %1566 = vmatprep.mubr.f32.mxu0 0.0
    %v1567 = vand.u32 %v1298, 4294901760
    %1568 = vmatmul.mubr.f32.gmra.mxu0 %v1567
    %v1569 = vpop.f32.mrf.mxu0
    %v1570 = vadd.f32 %v1409, %v1569
    %v1571 = vpop.f32.mrf.mxu0
    %1572 = vmatprep.mubr.f32.mxu0 0.0
    %v1573 = vand.u32 %v1299, 4294901760
    %1574 = vmatmul.mubr.f32.gmra.mxu0 %v1573
    %v1575 = vpop.f32.mrf.mxu0
    %v1576 = vadd.f32 %v1419, %v1575
    %v1577 = vpop.f32.mrf.mxu0
    %1578 = vdwg.mxu0
    %1579 = vmatprep.subr.mxu0 0.0
    %v1580 = vand.u32 %v1316, 4294901760
    %v1581 = vsub.f32 %v1316, %v1580
    %1582 = vmatpush1.msra.mxu0 %v1581
    %1583 = vmatprep.subr.mxu0 0.0
    %v1584 = vand.u32 %v1315, 4294901760
    %v1585 = vsub.f32 %v1315, %v1584
    %1586 = vmatpush1.msra.mxu0 %v1585
    %1587 = vmatprep.subr.mxu0 0.0
    %v1588 = vand.u32 %v1314, 4294901760
    %v1589 = vsub.f32 %v1314, %v1588
    %1590 = vmatpush1.msra.mxu0 %v1589
    %1591 = vmatprep.subr.mxu0 0.0
    %v1592 = vand.u32 %v1313, 4294901760
    %v1593 = vsub.f32 %v1313, %v1592
    %1594 = vmatpush1.msra.mxu0 %v1593
    %1595 = vmatprep.subr.mxu0 0.0
    %v1596 = vand.u32 %v1312, 4294901760
    %v1597 = vsub.f32 %v1312, %v1596
    %1598 = vmatpush1.msra.mxu0 %v1597
    %1599 = vmatprep.subr.mxu0 0.0
    %v1600 = vand.u32 %v1311, 4294901760
    %v1601 = vsub.f32 %v1311, %v1600
    %1602 = vmatpush1.msra.mxu0 %v1601
    %1603 = vmatprep.subr.mxu0 0.0
    %v1604 = vand.u32 %v1310, 4294901760
    %v1605 = vsub.f32 %v1310, %v1604
    %1606 = vmatpush1.msra.mxu0 %v1605
    %1607 = vmatprep.subr.mxu0 0.0
    %v1608 = vand.u32 %v1309, 4294901760
    %v1609 = vsub.f32 %v1309, %v1608
    %1610 = vmatpush1.msra.mxu0 %v1609
    %1611 = vmatprep.subr.mxu0 0.0
    %v1612 = vand.u32 %v1308, 4294901760
    %v1613 = vsub.f32 %v1308, %v1612
    %1614 = vmatpush1.msra.mxu0 %v1613
    %1615 = vmatprep.subr.mxu0 0.0
    %v1616 = vand.u32 %v1307, 4294901760
    %v1617 = vsub.f32 %v1307, %v1616
    %1618 = vmatpush1.msra.mxu0 %v1617
    %1619 = vmatprep.subr.mxu0 0.0
    %v1620 = vand.u32 %v1306, 4294901760
    %v1621 = vsub.f32 %v1306, %v1620
    %1622 = vmatpush1.msra.mxu0 %v1621
    %1623 = vmatprep.subr.mxu0 0.0
    %v1624 = vand.u32 %v1305, 4294901760
    %v1625 = vsub.f32 %v1305, %v1624
    %1626 = vmatpush1.msra.mxu0 %v1625
    %1627 = vmatprep.subr.mxu0 0.0
    %v1628 = vand.u32 %v1304, 4294901760
    %v1629 = vsub.f32 %v1304, %v1628
    %1630 = vmatpush1.msra.mxu0 %v1629
    %1631 = vmatprep.subr.mxu0 0.0
    %v1632 = vand.u32 %v1303, 4294901760
    %v1633 = vsub.f32 %v1303, %v1632
    %1634 = vmatpush1.msra.mxu0 %v1633
    %1635 = vmatprep.subr.mxu0 0.0
    %v1636 = vand.u32 %v1302, 4294901760
    %v1637 = vsub.f32 %v1302, %v1636
    %1638 = vmatpush1.msra.mxu0 %v1637
    %1639 = vmatprep.subr.mxu0 0.0
    %v1640 = vand.u32 %v1301, 4294901760
    %v1641 = vsub.f32 %v1301, %v1640
    %1642 = vmatpush1.msra.mxu0 %v1641
    %1643 = vmatprep.subr.mxu0 0.0
    %1644 = vmatpush2.msra.mxu0 0.0
    %1645 = vmatprep.subr.mxu0 0.0
    %1646 = vmatpush2.msra.mxu0 0.0
    %1647 = vmatprep.subr.mxu0 0.0
    %1648 = vmatpush2.msra.mxu0 0.0
    %1649 = vmatprep.subr.mxu0 0.0
    %1650 = vmatpush2.msra.mxu0 0.0
    %1651 = vmatprep.subr.mxu0 0.0
    %1652 = vmatpush2.msra.mxu0 0.0
    %1653 = vmatprep.subr.mxu0 0.0
    %1654 = vmatpush2.msra.mxu0 0.0
    %1655 = vmatprep.subr.mxu0 0.0
    %1656 = vmatpush2.msra.mxu0 0.0
    %1657 = vmatprep.subr.mxu0 0.0
    %1658 = vmatpush2.msra.mxu0 0.0
    %1659 = vmatprep.subr.mxu0 0.0
    %1660 = vmatpush2.msra.mxu0 0.0
    %1661 = vmatprep.subr.mxu0 0.0
    %1662 = vmatpush2.msra.mxu0 0.0
    %1663 = vmatprep.subr.mxu0 0.0
    %1664 = vmatpush2.msra.mxu0 0.0
    %1665 = vmatprep.subr.mxu0 0.0
    %1666 = vmatpush2.msra.mxu0 0.0
    %1667 = vmatprep.subr.mxu0 0.0
    %1668 = vmatpush2.msra.mxu0 0.0
    %1669 = vmatprep.subr.mxu0 0.0
    %1670 = vmatpush2.msra.mxu0 0.0
    %1671 = vmatprep.subr.mxu0 0.0
    %1672 = vmatpush2.msra.mxu0 0.0
    %1673 = vmatprep.subr.mxu0 0.0
    %1674 = vmatpush2.msra.mxu0 0.0
    %1675 = vmatprep.mubr.f32.mxu0 0.0
    %v1676 = vand.u32 %v1298, 4294901760
    %v1677 = vsub.f32 %v1298, %v1676
    %1678 = vmatmul.mubr.f32.gmra.mxu0 %v1677
    %v1679 = vpop.f32.mrf.mxu0
    %v1680 = vadd.f32 %v1570, %v1679
    %v1681 = vpop.f32.mrf.mxu0
    %1682 = vmatprep.mubr.f32.mxu0 0.0
    %v1683 = vand.u32 %v1299, 4294901760
    %v1684 = vsub.f32 %v1299, %v1683
    %1685 = vmatmul.mubr.f32.gmra.mxu0 %v1684
    %v1686 = vpop.f32.mrf.mxu0
    %v1687 = vadd.f32 %v1576, %v1686
    %v1688 = vpop.f32.mrf.mxu0
    %1689 = vdwg.mxu0
    %1690 = vmatprep.subr.mxu0 0.0
    %v1691 = vand.u32 %v1316, 4294901760
    %1692 = vmatpush1.msra.mxu0 %v1691
    %1693 = vmatprep.subr.mxu0 0.0
    %v1694 = vand.u32 %v1315, 4294901760
    %1695 = vmatpush1.msra.mxu0 %v1694
    %1696 = vmatprep.subr.mxu0 0.0
    %v1697 = vand.u32 %v1314, 4294901760
    %1698 = vmatpush1.msra.mxu0 %v1697
    %1699 = vmatprep.subr.mxu0 0.0
    %v1700 = vand.u32 %v1313, 4294901760
    %1701 = vmatpush1.msra.mxu0 %v1700
    %1702 = vmatprep.subr.mxu0 0.0
    %v1703 = vand.u32 %v1312, 4294901760
    %1704 = vmatpush1.msra.mxu0 %v1703
    %1705 = vmatprep.subr.mxu0 0.0
    %v1706 = vand.u32 %v1311, 4294901760
    %1707 = vmatpush1.msra.mxu0 %v1706
    %1708 = vmatprep.subr.mxu0 0.0
    %v1709 = vand.u32 %v1310, 4294901760
    %1710 = vmatpush1.msra.mxu0 %v1709
    %1711 = vmatprep.subr.mxu0 0.0
    %v1712 = vand.u32 %v1309, 4294901760
    %1713 = vmatpush1.msra.mxu0 %v1712
    %1714 = vmatprep.subr.mxu0 0.0
    %v1715 = vand.u32 %v1308, 4294901760
    %1716 = vmatpush1.msra.mxu0 %v1715
    %1717 = vmatprep.subr.mxu0 0.0
    %v1718 = vand.u32 %v1307, 4294901760
    %1719 = vmatpush1.msra.mxu0 %v1718
    %1720 = vmatprep.subr.mxu0 0.0
    %v1721 = vand.u32 %v1306, 4294901760
    %1722 = vmatpush1.msra.mxu0 %v1721
    %1723 = vmatprep.subr.mxu0 0.0
    %v1724 = vand.u32 %v1305, 4294901760
    %1725 = vmatpush1.msra.mxu0 %v1724
    %1726 = vmatprep.subr.mxu0 0.0
    %v1727 = vand.u32 %v1304, 4294901760
    %1728 = vmatpush1.msra.mxu0 %v1727
    %1729 = vmatprep.subr.mxu0 0.0
    %v1730 = vand.u32 %v1303, 4294901760
    %1731 = vmatpush1.msra.mxu0 %v1730
    %1732 = vmatprep.subr.mxu0 0.0
    %v1733 = vand.u32 %v1302, 4294901760
    %1734 = vmatpush1.msra.mxu0 %v1733
    %1735 = vmatprep.subr.mxu0 0.0
    %v1736 = vand.u32 %v1301, 4294901760
    %1737 = vmatpush1.msra.mxu0 %v1736
    %1738 = vmatprep.subr.mxu0 0.0
    %1739 = vmatpush2.msra.mxu0 0.0
    %1740 = vmatprep.subr.mxu0 0.0
    %1741 = vmatpush2.msra.mxu0 0.0
    %1742 = vmatprep.subr.mxu0 0.0
    %1743 = vmatpush2.msra.mxu0 0.0
    %1744 = vmatprep.subr.mxu0 0.0
    %1745 = vmatpush2.msra.mxu0 0.0
    %1746 = vmatprep.subr.mxu0 0.0
    %1747 = vmatpush2.msra.mxu0 0.0
    %1748 = vmatprep.subr.mxu0 0.0
    %1749 = vmatpush2.msra.mxu0 0.0
    %1750 = vmatprep.subr.mxu0 0.0
    %1751 = vmatpush2.msra.mxu0 0.0
    %1752 = vmatprep.subr.mxu0 0.0
    %1753 = vmatpush2.msra.mxu0 0.0
    %1754 = vmatprep.subr.mxu0 0.0
    %1755 = vmatpush2.msra.mxu0 0.0
    %1756 = vmatprep.subr.mxu0 0.0
    %1757 = vmatpush2.msra.mxu0 0.0
    %1758 = vmatprep.subr.mxu0 0.0
    %1759 = vmatpush2.msra.mxu0 0.0
    %1760 = vmatprep.subr.mxu0 0.0
    %1761 = vmatpush2.msra.mxu0 0.0
    %1762 = vmatprep.subr.mxu0 0.0
    %1763 = vmatpush2.msra.mxu0 0.0
    %1764 = vmatprep.subr.mxu0 0.0
    %1765 = vmatpush2.msra.mxu0 0.0
    %1766 = vmatprep.subr.mxu0 0.0
    %1767 = vmatpush2.msra.mxu0 0.0
    %1768 = vmatprep.subr.mxu0 0.0
    %1769 = vmatpush2.msra.mxu0 0.0
    %1770 = vmatprep.mubr.f32.mxu0 0.0
    %v1771 = vand.u32 %v1298, 4294901760
    %v1772 = vsub.f32 %v1298, %v1771
    %v1773 = vand.u32 %v1772, 4294901760
    %1774 = vmatmul.mubr.f32.gmra.mxu0 %v1773
    %v1775 = vpop.f32.mrf.mxu0
    %v1776 = vadd.f32 %v1680, %v1775
    %v1777 = vpop.f32.mrf.mxu0
    %1778 = vmatprep.mubr.f32.mxu0 0.0
    %v1779 = vand.u32 %v1299, 4294901760
    %v1780 = vsub.f32 %v1299, %v1779
    %v1781 = vand.u32 %v1780, 4294901760
    %1782 = vmatmul.mubr.f32.gmra.mxu0 %v1781
    %v1783 = vpop.f32.mrf.mxu0
    %v1784 = vadd.f32 %v1687, %v1783
    %v1785 = vpop.f32.mrf.mxu0
    %1786 = vdwg.mxu0
    %1787 = vmatprep.subr.mxu0 0.0
    %v1788 = vand.u32 %v1316, 4294901760
    %v1789 = vsub.f32 %v1316, %v1788
    %v1790 = vand.u32 %v1789, 4294901760
    %1791 = vmatpush1.msra.mxu0 %v1790
    %1792 = vmatprep.subr.mxu0 0.0
    %v1793 = vand.u32 %v1315, 4294901760
    %v1794 = vsub.f32 %v1315, %v1793
    %v1795 = vand.u32 %v1794, 4294901760
    %1796 = vmatpush1.msra.mxu0 %v1795
    %1797 = vmatprep.subr.mxu0 0.0
    %v1798 = vand.u32 %v1314, 4294901760
    %v1799 = vsub.f32 %v1314, %v1798
    %v1800 = vand.u32 %v1799, 4294901760
    %1801 = vmatpush1.msra.mxu0 %v1800
    %1802 = vmatprep.subr.mxu0 0.0
    %v1803 = vand.u32 %v1313, 4294901760
    %v1804 = vsub.f32 %v1313, %v1803
    %v1805 = vand.u32 %v1804, 4294901760
    %1806 = vmatpush1.msra.mxu0 %v1805
    %1807 = vmatprep.subr.mxu0 0.0
    %v1808 = vand.u32 %v1312, 4294901760
    %v1809 = vsub.f32 %v1312, %v1808
    %v1810 = vand.u32 %v1809, 4294901760
    %1811 = vmatpush1.msra.mxu0 %v1810
    %1812 = vmatprep.subr.mxu0 0.0
    %v1813 = vand.u32 %v1311, 4294901760
    %v1814 = vsub.f32 %v1311, %v1813
    %v1815 = vand.u32 %v1814, 4294901760
    %1816 = vmatpush1.msra.mxu0 %v1815
    %1817 = vmatprep.subr.mxu0 0.0
    %v1818 = vand.u32 %v1310, 4294901760
    %v1819 = vsub.f32 %v1310, %v1818
    %v1820 = vand.u32 %v1819, 4294901760
    %1821 = vmatpush1.msra.mxu0 %v1820
    %1822 = vmatprep.subr.mxu0 0.0
    %v1823 = vand.u32 %v1309, 4294901760
    %v1824 = vsub.f32 %v1309, %v1823
    %v1825 = vand.u32 %v1824, 4294901760
    %1826 = vmatpush1.msra.mxu0 %v1825
    %1827 = vmatprep.subr.mxu0 0.0
    %v1828 = vand.u32 %v1308, 4294901760
    %v1829 = vsub.f32 %v1308, %v1828
    %v1830 = vand.u32 %v1829, 4294901760
    %1831 = vmatpush1.msra.mxu0 %v1830
    %1832 = vmatprep.subr.mxu0 0.0
    %v1833 = vand.u32 %v1307, 4294901760
    %v1834 = vsub.f32 %v1307, %v1833
    %v1835 = vand.u32 %v1834, 4294901760
    %1836 = vmatpush1.msra.mxu0 %v1835
    %1837 = vmatprep.subr.mxu0 0.0
    %v1838 = vand.u32 %v1306, 4294901760
    %v1839 = vsub.f32 %v1306, %v1838
    %v1840 = vand.u32 %v1839, 4294901760
    %1841 = vmatpush1.msra.mxu0 %v1840
    %1842 = vmatprep.subr.mxu0 0.0
    %v1843 = vand.u32 %v1305, 4294901760
    %v1844 = vsub.f32 %v1305, %v1843
    %v1845 = vand.u32 %v1844, 4294901760
    %1846 = vmatpush1.msra.mxu0 %v1845
    %1847 = vmatprep.subr.mxu0 0.0
    %v1848 = vand.u32 %v1304, 4294901760
    %v1849 = vsub.f32 %v1304, %v1848
    %v1850 = vand.u32 %v1849, 4294901760
    %1851 = vmatpush1.msra.mxu0 %v1850
    %1852 = vmatprep.subr.mxu0 0.0
    %v1853 = vand.u32 %v1303, 4294901760
    %v1854 = vsub.f32 %v1303, %v1853
    %v1855 = vand.u32 %v1854, 4294901760
    %1856 = vmatpush1.msra.mxu0 %v1855
    %1857 = vmatprep.subr.mxu0 0.0
    %v1858 = vand.u32 %v1302, 4294901760
    %v1859 = vsub.f32 %v1302, %v1858
    %v1860 = vand.u32 %v1859, 4294901760
    %1861 = vmatpush1.msra.mxu0 %v1860
    %1862 = vmatprep.subr.mxu0 0.0
    %v1863 = vand.u32 %v1301, 4294901760
    %v1864 = vsub.f32 %v1301, %v1863
    %v1865 = vand.u32 %v1864, 4294901760
    %1866 = vmatpush1.msra.mxu0 %v1865
    %1867 = vmatprep.subr.mxu0 0.0
    %1868 = vmatpush2.msra.mxu0 0.0
    %1869 = vmatprep.subr.mxu0 0.0
    %1870 = vmatpush2.msra.mxu0 0.0
    %1871 = vmatprep.subr.mxu0 0.0
    %1872 = vmatpush2.msra.mxu0 0.0
    %1873 = vmatprep.subr.mxu0 0.0
    %1874 = vmatpush2.msra.mxu0 0.0
    %1875 = vmatprep.subr.mxu0 0.0
    %1876 = vmatpush2.msra.mxu0 0.0
    %1877 = vmatprep.subr.mxu0 0.0
    %1878 = vmatpush2.msra.mxu0 0.0
    %1879 = vmatprep.subr.mxu0 0.0
    %1880 = vmatpush2.msra.mxu0 0.0
    %1881 = vmatprep.subr.mxu0 0.0
    %1882 = vmatpush2.msra.mxu0 0.0
    %1883 = vmatprep.subr.mxu0 0.0
    %1884 = vmatpush2.msra.mxu0 0.0
    %1885 = vmatprep.subr.mxu0 0.0
    %1886 = vmatpush2.msra.mxu0 0.0
    %1887 = vmatprep.subr.mxu0 0.0
    %1888 = vmatpush2.msra.mxu0 0.0
    %1889 = vmatprep.subr.mxu0 0.0
    %1890 = vmatpush2.msra.mxu0 0.0
    %1891 = vmatprep.subr.mxu0 0.0
    %1892 = vmatpush2.msra.mxu0 0.0
    %1893 = vmatprep.subr.mxu0 0.0
    %1894 = vmatpush2.msra.mxu0 0.0
    %1895 = vmatprep.subr.mxu0 0.0
    %1896 = vmatpush2.msra.mxu0 0.0
    %1897 = vmatprep.subr.mxu0 0.0
    %1898 = vmatpush2.msra.mxu0 0.0
    %1899 = vmatprep.mubr.f32.mxu0 0.0
    %v1900 = vand.u32 %v1298, 4294901760
    %1901 = vmatmul.mubr.f32.gmra.mxu0 %v1900
    %v1902 = vpop.f32.mrf.mxu0
    %v1903 = vadd.f32 %v1776, %v1902
    %v1904 = vpop.f32.mrf.mxu0
    %1905 = vmatprep.mubr.f32.mxu0 0.0
    %v1906 = vand.u32 %v1299, 4294901760
    %1907 = vmatmul.mubr.f32.gmra.mxu0 %v1906
    %v1908 = vpop.f32.mrf.mxu0
    %v1909 = vadd.f32 %v1784, %v1908
    %v1910 = vpop.f32.mrf.mxu0
    %1911 = vdwg.mxu0
    %1912 = vmatprep.subr.mxu0 0.0
    %v1913 = vand.u32 %v1316, 4294901760
    %1914 = vmatpush1.msra.mxu0 %v1913
    %1915 = vmatprep.subr.mxu0 0.0
    %v1916 = vand.u32 %v1315, 4294901760
    %1917 = vmatpush1.msra.mxu0 %v1916
    %1918 = vmatprep.subr.mxu0 0.0
    %v1919 = vand.u32 %v1314, 4294901760
    %1920 = vmatpush1.msra.mxu0 %v1919
    %1921 = vmatprep.subr.mxu0 0.0
    %v1922 = vand.u32 %v1313, 4294901760
    %1923 = vmatpush1.msra.mxu0 %v1922
    %1924 = vmatprep.subr.mxu0 0.0
    %v1925 = vand.u32 %v1312, 4294901760
    %1926 = vmatpush1.msra.mxu0 %v1925
    %1927 = vmatprep.subr.mxu0 0.0
    %v1928 = vand.u32 %v1311, 4294901760
    %1929 = vmatpush1.msra.mxu0 %v1928
    %1930 = vmatprep.subr.mxu0 0.0
    %v1931 = vand.u32 %v1310, 4294901760
    %1932 = vmatpush1.msra.mxu0 %v1931
    %1933 = vmatprep.subr.mxu0 0.0
    %v1934 = vand.u32 %v1309, 4294901760
    %1935 = vmatpush1.msra.mxu0 %v1934
    %1936 = vmatprep.subr.mxu0 0.0
    %v1937 = vand.u32 %v1308, 4294901760
    %1938 = vmatpush1.msra.mxu0 %v1937
    %1939 = vmatprep.subr.mxu0 0.0
    %v1940 = vand.u32 %v1307, 4294901760
    %1941 = vmatpush1.msra.mxu0 %v1940
    %1942 = vmatprep.subr.mxu0 0.0
    %v1943 = vand.u32 %v1306, 4294901760
    %1944 = vmatpush1.msra.mxu0 %v1943
    %1945 = vmatprep.subr.mxu0 0.0
    %v1946 = vand.u32 %v1305, 4294901760
    %1947 = vmatpush1.msra.mxu0 %v1946
    %1948 = vmatprep.subr.mxu0 0.0
    %v1949 = vand.u32 %v1304, 4294901760
    %1950 = vmatpush1.msra.mxu0 %v1949
    %1951 = vmatprep.subr.mxu0 0.0
    %v1952 = vand.u32 %v1303, 4294901760
    %1953 = vmatpush1.msra.mxu0 %v1952
    %1954 = vmatprep.subr.mxu0 0.0
    %v1955 = vand.u32 %v1302, 4294901760
    %1956 = vmatpush1.msra.mxu0 %v1955
    %1957 = vmatprep.subr.mxu0 0.0
    %v1958 = vand.u32 %v1301, 4294901760
    %1959 = vmatpush1.msra.mxu0 %v1958
    %1960 = vmatprep.subr.mxu0 0.0
    %1961 = vmatpush2.msra.mxu0 0.0
    %1962 = vmatprep.subr.mxu0 0.0
    %1963 = vmatpush2.msra.mxu0 0.0
    %1964 = vmatprep.subr.mxu0 0.0
    %1965 = vmatpush2.msra.mxu0 0.0
    %1966 = vmatprep.subr.mxu0 0.0
    %1967 = vmatpush2.msra.mxu0 0.0
    %1968 = vmatprep.subr.mxu0 0.0
    %1969 = vmatpush2.msra.mxu0 0.0
    %1970 = vmatprep.subr.mxu0 0.0
    %1971 = vmatpush2.msra.mxu0 0.0
    %1972 = vmatprep.subr.mxu0 0.0
    %1973 = vmatpush2.msra.mxu0 0.0
    %1974 = vmatprep.subr.mxu0 0.0
    %1975 = vmatpush2.msra.mxu0 0.0
    %1976 = vmatprep.subr.mxu0 0.0
    %1977 = vmatpush2.msra.mxu0 0.0
    %1978 = vmatprep.subr.mxu0 0.0
    %1979 = vmatpush2.msra.mxu0 0.0
    %1980 = vmatprep.subr.mxu0 0.0
    %1981 = vmatpush2.msra.mxu0 0.0
    %1982 = vmatprep.subr.mxu0 0.0
    %1983 = vmatpush2.msra.mxu0 0.0
    %1984 = vmatprep.subr.mxu0 0.0
    %1985 = vmatpush2.msra.mxu0 0.0
    %1986 = vmatprep.subr.mxu0 0.0
    %1987 = vmatpush2.msra.mxu0 0.0
    %1988 = vmatprep.subr.mxu0 0.0
    %1989 = vmatpush2.msra.mxu0 0.0
    %1990 = vmatprep.subr.mxu0 0.0
    %1991 = vmatpush2.msra.mxu0 0.0
    %1992 = vmatprep.mubr.f32.mxu0 0.0
    %v1993 = vand.u32 %v1298, 4294901760
    %1994 = vmatmul.mubr.f32.gmra.mxu0 %v1993
    %v1995 = vpop.f32.mrf.mxu0
    %v1996 = vadd.f32 %v1903, %v1995
    %v1997 = vpop.f32.mrf.mxu0
    %1998 = vmatprep.mubr.f32.mxu0 0.0
    %v1999 = vand.u32 %v1299, 4294901760
    %2000 = vmatmul.mubr.f32.gmra.mxu0 %v1999
    %v2001 = vpop.f32.mrf.mxu0
    %v2002 = vadd.f32 %v1909, %v2001
    %v2003 = vpop.f32.mrf.mxu0
    %2004 = vdwg.mxu0
    %vm2005 = vcmp.gt.f32.partialorder %v1996, 0.0
    %vm2006 = vcmp.gt.f32.partialorder %v2002, 0.0
    %v2007 = vmul.f32 %v1996, 0.01
    %v2008 = vmul.f32 %v2002, 0.01
    %v2009 = vsel %vm2005, %v1996, %v2007
    %v2010 = vsel %vm2006, %v2002, %v2008
    %v2011 = vld [vmem:[%s3] sm:$0xff]
    %v2012 = vld [vmem:[%s3 + $0x8] sm:$0xff]
    %v2013 = vld [vmem:[%s3 + $0x10] sm:$0xff]
    %v2014 = vld [vmem:[%s3 + $0x18] sm:$0xff]
    %v2015 = vld [vmem:[%s3 + $0x20] sm:$0xff]
    %v2016 = vld [vmem:[%s3 + $0x28] sm:$0xff]
    %v2017 = vld [vmem:[%s3 + $0x30] sm:$0xff]
    %v2018 = vld [vmem:[%s3 + $0x38] sm:$0xff]
    %v2019 = vld [vmem:[%s3 + $0x40] sm:$0xff]
    %v2020 = vld [vmem:[%s3 + $0x48] sm:$0xff]
    %v2021 = vld [vmem:[%s3 + $0x50] sm:$0xff]
    %v2022 = vld [vmem:[%s3 + $0x58] sm:$0xff]
    %v2023 = vld [vmem:[%s3 + $0x60] sm:$0xff]
    %v2024 = vld [vmem:[%s3 + $0x68] sm:$0xff]
    %v2025 = vld [vmem:[%s3 + $0x70] sm:$0xff]
    %v2026 = vld [vmem:[%s3 + $0x78] sm:$0xff]
    %v2027 = vld [vmem:[%s5] sm:$0x1]
    %v2029 = vlaneseq
    %v2030 = vshrl.u32 %v2029, 7
    %v2031 = vsub.s32 0, %v2030
    %v2032 = vrot.slane %v2027, %v2031
    %2034 = vmatprep.subr.mxu0 0.0
    %v2035 = vand.u32 %v2026, 4294901760
    %2036 = vmatpush1.msra.mxu0 %v2035
    %2037 = vmatprep.subr.mxu0 0.0
    %v2038 = vand.u32 %v2025, 4294901760
    %2039 = vmatpush1.msra.mxu0 %v2038
    %2040 = vmatprep.subr.mxu0 0.0
    %v2041 = vand.u32 %v2024, 4294901760
    %2042 = vmatpush1.msra.mxu0 %v2041
    %2043 = vmatprep.subr.mxu0 0.0
    %v2044 = vand.u32 %v2023, 4294901760
    %2045 = vmatpush1.msra.mxu0 %v2044
    %2046 = vmatprep.subr.mxu0 0.0
    %v2047 = vand.u32 %v2022, 4294901760
    %2048 = vmatpush1.msra.mxu0 %v2047
    %2049 = vmatprep.subr.mxu0 0.0
    %v2050 = vand.u32 %v2021, 4294901760
    %2051 = vmatpush1.msra.mxu0 %v2050
    %2052 = vmatprep.subr.mxu0 0.0
    %v2053 = vand.u32 %v2020, 4294901760
    %2054 = vmatpush1.msra.mxu0 %v2053
    %2055 = vmatprep.subr.mxu0 0.0
    %v2056 = vand.u32 %v2019, 4294901760
    %2057 = vmatpush1.msra.mxu0 %v2056
    %2058 = vmatprep.subr.mxu0 0.0
    %v2059 = vand.u32 %v2018, 4294901760
    %2060 = vmatpush1.msra.mxu0 %v2059
    %2061 = vmatprep.subr.mxu0 0.0
    %v2062 = vand.u32 %v2017, 4294901760
    %2063 = vmatpush1.msra.mxu0 %v2062
    %2064 = vmatprep.subr.mxu0 0.0
    %v2065 = vand.u32 %v2016, 4294901760
    %2066 = vmatpush1.msra.mxu0 %v2065
    %2067 = vmatprep.subr.mxu0 0.0
    %v2068 = vand.u32 %v2015, 4294901760
    %2069 = vmatpush1.msra.mxu0 %v2068
    %2070 = vmatprep.subr.mxu0 0.0
    %v2071 = vand.u32 %v2014, 4294901760
    %2072 = vmatpush1.msra.mxu0 %v2071
    %2073 = vmatprep.subr.mxu0 0.0
    %v2074 = vand.u32 %v2013, 4294901760
    %2075 = vmatpush1.msra.mxu0 %v2074
    %2076 = vmatprep.subr.mxu0 0.0
    %v2077 = vand.u32 %v2012, 4294901760
    %2078 = vmatpush1.msra.mxu0 %v2077
    %2079 = vmatprep.subr.mxu0 0.0
    %v2080 = vand.u32 %v2011, 4294901760
    %2081 = vmatpush1.msra.mxu0 %v2080
    %2082 = vmatprep.subr.mxu0 0.0
    %2083 = vmatpush2.msra.mxu0 0.0
    %2084 = vmatprep.subr.mxu0 0.0
    %2085 = vmatpush2.msra.mxu0 0.0
    %2086 = vmatprep.subr.mxu0 0.0
    %2087 = vmatpush2.msra.mxu0 0.0
    %2088 = vmatprep.subr.mxu0 0.0
    %2089 = vmatpush2.msra.mxu0 0.0
    %2090 = vmatprep.subr.mxu0 0.0
    %2091 = vmatpush2.msra.mxu0 0.0
    %2092 = vmatprep.subr.mxu0 0.0
    %2093 = vmatpush2.msra.mxu0 0.0
    %2094 = vmatprep.subr.mxu0 0.0
    %2095 = vmatpush2.msra.mxu0 0.0
    %2096 = vmatprep.subr.mxu0 0.0
    %2097 = vmatpush2.msra.mxu0 0.0
    %2098 = vmatprep.subr.mxu0 0.0
    %2099 = vmatpush2.msra.mxu0 0.0
    %2100 = vmatprep.subr.mxu0 0.0
    %2101 = vmatpush2.msra.mxu0 0.0
    %2102 = vmatprep.subr.mxu0 0.0
    %2103 = vmatpush2.msra.mxu0 0.0
    %2104 = vmatprep.subr.mxu0 0.0
    %2105 = vmatpush2.msra.mxu0 0.0
    %2106 = vmatprep.subr.mxu0 0.0
    %2107 = vmatpush2.msra.mxu0 0.0
    %2108 = vmatprep.subr.mxu0 0.0
    %2109 = vmatpush2.msra.mxu0 0.0
    %2110 = vmatprep.subr.mxu0 0.0
    %2111 = vmatpush2.msra.mxu0 0.0
    %2112 = vmatprep.subr.mxu0 0.0
    %2113 = vmatpush2.msra.mxu0 0.0
    %2114 = vmatprep.mubr.f32.mxu0 0.0
    %v2115 = vand.u32 %v2009, 4294901760
    %v2116 = vsub.f32 %v2009, %v2115
    %v2117 = vand.u32 %v2116, 4294901760
    %v2118 = vsub.f32 %v2116, %v2117
    %v2119 = vand.u32 %v2118, 4294901760
    %2120 = vmatmul.mubr.f32.gmra.mxu0 %v2119
    %v2121 = vpop.f32.mrf.mxu0
    %v2122 = vadd.f32 %v2032, %v2121
    %v2123 = vpop.f32.mrf.mxu0
    %2124 = vmatprep.mubr.f32.mxu0 0.0
    %v2125 = vand.u32 %v2010, 4294901760
    %v2126 = vsub.f32 %v2010, %v2125
    %v2127 = vand.u32 %v2126, 4294901760
    %v2128 = vsub.f32 %v2126, %v2127
    %v2129 = vand.u32 %v2128, 4294901760
    %2130 = vmatmul.mubr.f32.gmra.mxu0 %v2129
    %v2131 = vpop.f32.mrf.mxu0
    %v2132 = vadd.f32 %v2032, %v2131
    %v2133 = vpop.f32.mrf.mxu0
    %2134 = vdwg.mxu0
    %2135 = vmatprep.subr.mxu0 0.0
    %v2136 = vand.u32 %v2026, 4294901760
    %v2137 = vsub.f32 %v2026, %v2136
    %v2138 = vand.u32 %v2137, 4294901760
    %v2139 = vsub.f32 %v2137, %v2138
    %v2140 = vand.u32 %v2139, 4294901760
    %2141 = vmatpush1.msra.mxu0 %v2140
    %2142 = vmatprep.subr.mxu0 0.0
    %v2143 = vand.u32 %v2025, 4294901760
    %v2144 = vsub.f32 %v2025, %v2143
    %v2145 = vand.u32 %v2144, 4294901760
    %v2146 = vsub.f32 %v2144, %v2145
    %v2147 = vand.u32 %v2146, 4294901760
    %2148 = vmatpush1.msra.mxu0 %v2147
    %2149 = vmatprep.subr.mxu0 0.0
    %v2150 = vand.u32 %v2024, 4294901760
    %v2151 = vsub.f32 %v2024, %v2150
    %v2152 = vand.u32 %v2151, 4294901760
    %v2153 = vsub.f32 %v2151, %v2152
    %v2154 = vand.u32 %v2153, 4294901760
    %2155 = vmatpush1.msra.mxu0 %v2154
    %2156 = vmatprep.subr.mxu0 0.0
    %v2157 = vand.u32 %v2023, 4294901760
    %v2158 = vsub.f32 %v2023, %v2157
    %v2159 = vand.u32 %v2158, 4294901760
    %v2160 = vsub.f32 %v2158, %v2159
    %v2161 = vand.u32 %v2160, 4294901760
    %2162 = vmatpush1.msra.mxu0 %v2161
    %2163 = vmatprep.subr.mxu0 0.0
    %v2164 = vand.u32 %v2022, 4294901760
    %v2165 = vsub.f32 %v2022, %v2164
    %v2166 = vand.u32 %v2165, 4294901760
    %v2167 = vsub.f32 %v2165, %v2166
    %v2168 = vand.u32 %v2167, 4294901760
    %2169 = vmatpush1.msra.mxu0 %v2168
    %2170 = vmatprep.subr.mxu0 0.0
    %v2171 = vand.u32 %v2021, 4294901760
    %v2172 = vsub.f32 %v2021, %v2171
    %v2173 = vand.u32 %v2172, 4294901760
    %v2174 = vsub.f32 %v2172, %v2173
    %v2175 = vand.u32 %v2174, 4294901760
    %2176 = vmatpush1.msra.mxu0 %v2175
    %2177 = vmatprep.subr.mxu0 0.0
    %v2178 = vand.u32 %v2020, 4294901760
    %v2179 = vsub.f32 %v2020, %v2178
    %v2180 = vand.u32 %v2179, 4294901760
    %v2181 = vsub.f32 %v2179, %v2180
    %v2182 = vand.u32 %v2181, 4294901760
    %2183 = vmatpush1.msra.mxu0 %v2182
    %2184 = vmatprep.subr.mxu0 0.0
    %v2185 = vand.u32 %v2019, 4294901760
    %v2186 = vsub.f32 %v2019, %v2185
    %v2187 = vand.u32 %v2186, 4294901760
    %v2188 = vsub.f32 %v2186, %v2187
    %v2189 = vand.u32 %v2188, 4294901760
    %2190 = vmatpush1.msra.mxu0 %v2189
    %2191 = vmatprep.subr.mxu0 0.0
    %v2192 = vand.u32 %v2018, 4294901760
    %v2193 = vsub.f32 %v2018, %v2192
    %v2194 = vand.u32 %v2193, 4294901760
    %v2195 = vsub.f32 %v2193, %v2194
    %v2196 = vand.u32 %v2195, 4294901760
    %2197 = vmatpush1.msra.mxu0 %v2196
    %2198 = vmatprep.subr.mxu0 0.0
    %v2199 = vand.u32 %v2017, 4294901760
    %v2200 = vsub.f32 %v2017, %v2199
    %v2201 = vand.u32 %v2200, 4294901760
    %v2202 = vsub.f32 %v2200, %v2201
    %v2203 = vand.u32 %v2202, 4294901760
    %2204 = vmatpush1.msra.mxu0 %v2203
    %2205 = vmatprep.subr.mxu0 0.0
    %v2206 = vand.u32 %v2016, 4294901760
    %v2207 = vsub.f32 %v2016, %v2206
    %v2208 = vand.u32 %v2207, 4294901760
    %v2209 = vsub.f32 %v2207, %v2208
    %v2210 = vand.u32 %v2209, 4294901760
    %2211 = vmatpush1.msra.mxu0 %v2210
    %2212 = vmatprep.subr.mxu0 0.0
    %v2213 = vand.u32 %v2015, 4294901760
    %v2214 = vsub.f32 %v2015, %v2213
    %v2215 = vand.u32 %v2214, 4294901760
    %v2216 = vsub.f32 %v2214, %v2215
    %v2217 = vand.u32 %v2216, 4294901760
    %2218 = vmatpush1.msra.mxu0 %v2217
    %2219 = vmatprep.subr.mxu0 0.0
    %v2220 = vand.u32 %v2014, 4294901760
    %v2221 = vsub.f32 %v2014, %v2220
    %v2222 = vand.u32 %v2221, 4294901760
    %v2223 = vsub.f32 %v2221, %v2222
    %v2224 = vand.u32 %v2223, 4294901760
    %2225 = vmatpush1.msra.mxu0 %v2224
    %2226 = vmatprep.subr.mxu0 0.0
    %v2227 = vand.u32 %v2013, 4294901760
    %v2228 = vsub.f32 %v2013, %v2227
    %v2229 = vand.u32 %v2228, 4294901760
    %v2230 = vsub.f32 %v2228, %v2229
    %v2231 = vand.u32 %v2230, 4294901760
    %2232 = vmatpush1.msra.mxu0 %v2231
    %2233 = vmatprep.subr.mxu0 0.0
    %v2234 = vand.u32 %v2012, 4294901760
    %v2235 = vsub.f32 %v2012, %v2234
    %v2236 = vand.u32 %v2235, 4294901760
    %v2237 = vsub.f32 %v2235, %v2236
    %v2238 = vand.u32 %v2237, 4294901760
    %2239 = vmatpush1.msra.mxu0 %v2238
    %2240 = vmatprep.subr.mxu0 0.0
    %v2241 = vand.u32 %v2011, 4294901760
    %v2242 = vsub.f32 %v2011, %v2241
    %v2243 = vand.u32 %v2242, 4294901760
    %v2244 = vsub.f32 %v2242, %v2243
    %v2245 = vand.u32 %v2244, 4294901760
    %2246 = vmatpush1.msra.mxu0 %v2245
    %2247 = vmatprep.subr.mxu0 0.0
    %2248 = vmatpush2.msra.mxu0 0.0
    %2249 = vmatprep.subr.mxu0 0.0
    %2250 = vmatpush2.msra.mxu0 0.0
    %2251 = vmatprep.subr.mxu0 0.0
    %2252 = vmatpush2.msra.mxu0 0.0
    %2253 = vmatprep.subr.mxu0 0.0
    %2254 = vmatpush2.msra.mxu0 0.0
    %2255 = vmatprep.subr.mxu0 0.0
    %2256 = vmatpush2.msra.mxu0 0.0
    %2257 = vmatprep.subr.mxu0 0.0
    %2258 = vmatpush2.msra.mxu0 0.0
    %2259 = vmatprep.subr.mxu0 0.0
    %2260 = vmatpush2.msra.mxu0 0.0
    %2261 = vmatprep.subr.mxu0 0.0
    %2262 = vmatpush2.msra.mxu0 0.0
    %2263 = vmatprep.subr.mxu0 0.0
    %2264 = vmatpush2.msra.mxu0 0.0
    %2265 = vmatprep.subr.mxu0 0.0
    %2266 = vmatpush2.msra.mxu0 0.0
    %2267 = vmatprep.subr.mxu0 0.0
    %2268 = vmatpush2.msra.mxu0 0.0
    %2269 = vmatprep.subr.mxu0 0.0
    %2270 = vmatpush2.msra.mxu0 0.0
    %2271 = vmatprep.subr.mxu0 0.0
    %2272 = vmatpush2.msra.mxu0 0.0
    %2273 = vmatprep.subr.mxu0 0.0
    %2274 = vmatpush2.msra.mxu0 0.0
    %2275 = vmatprep.subr.mxu0 0.0
    %2276 = vmatpush2.msra.mxu0 0.0
    %2277 = vmatprep.subr.mxu0 0.0
    %2278 = vmatpush2.msra.mxu0 0.0
    %2279 = vmatprep.mubr.f32.mxu0 0.0
    %v2280 = vand.u32 %v2009, 4294901760
    %2281 = vmatmul.mubr.f32.gmra.mxu0 %v2280
    %v2282 = vpop.f32.mrf.mxu0
    %v2283 = vadd.f32 %v2122, %v2282
    %v2284 = vpop.f32.mrf.mxu0
    %2285 = vmatprep.mubr.f32.mxu0 0.0
    %v2286 = vand.u32 %v2010, 4294901760
    %2287 = vmatmul.mubr.f32.gmra.mxu0 %v2286
    %v2288 = vpop.f32.mrf.mxu0
    %v2289 = vadd.f32 %v2132, %v2288
    %v2290 = vpop.f32.mrf.mxu0
    %2291 = vdwg.mxu0
    %2292 = vmatprep.subr.mxu0 0.0
    %v2293 = vand.u32 %v2026, 4294901760
    %v2294 = vsub.f32 %v2026, %v2293
    %2295 = vmatpush1.msra.mxu0 %v2294
    %2296 = vmatprep.subr.mxu0 0.0
    %v2297 = vand.u32 %v2025, 4294901760
    %v2298 = vsub.f32 %v2025, %v2297
    %2299 = vmatpush1.msra.mxu0 %v2298
    %2300 = vmatprep.subr.mxu0 0.0
    %v2301 = vand.u32 %v2024, 4294901760
    %v2302 = vsub.f32 %v2024, %v2301
    %2303 = vmatpush1.msra.mxu0 %v2302
    %2304 = vmatprep.subr.mxu0 0.0
    %v2305 = vand.u32 %v2023, 4294901760
    %v2306 = vsub.f32 %v2023, %v2305
    %2307 = vmatpush1.msra.mxu0 %v2306
    %2308 = vmatprep.subr.mxu0 0.0
    %v2309 = vand.u32 %v2022, 4294901760
    %v2310 = vsub.f32 %v2022, %v2309
    %2311 = vmatpush1.msra.mxu0 %v2310
    %2312 = vmatprep.subr.mxu0 0.0
    %v2313 = vand.u32 %v2021, 4294901760
    %v2314 = vsub.f32 %v2021, %v2313
    %2315 = vmatpush1.msra.mxu0 %v2314
    %2316 = vmatprep.subr.mxu0 0.0
    %v2317 = vand.u32 %v2020, 4294901760
    %v2318 = vsub.f32 %v2020, %v2317
    %2319 = vmatpush1.msra.mxu0 %v2318
    %2320 = vmatprep.subr.mxu0 0.0
    %v2321 = vand.u32 %v2019, 4294901760
    %v2322 = vsub.f32 %v2019, %v2321
    %2323 = vmatpush1.msra.mxu0 %v2322
    %2324 = vmatprep.subr.mxu0 0.0
    %v2325 = vand.u32 %v2018, 4294901760
    %v2326 = vsub.f32 %v2018, %v2325
    %2327 = vmatpush1.msra.mxu0 %v2326
    %2328 = vmatprep.subr.mxu0 0.0
    %v2329 = vand.u32 %v2017, 4294901760
    %v2330 = vsub.f32 %v2017, %v2329
    %2331 = vmatpush1.msra.mxu0 %v2330
    %2332 = vmatprep.subr.mxu0 0.0
    %v2333 = vand.u32 %v2016, 4294901760
    %v2334 = vsub.f32 %v2016, %v2333
    %2335 = vmatpush1.msra.mxu0 %v2334
    %2336 = vmatprep.subr.mxu0 0.0
    %v2337 = vand.u32 %v2015, 4294901760
    %v2338 = vsub.f32 %v2015, %v2337
    %2339 = vmatpush1.msra.mxu0 %v2338
    %2340 = vmatprep.subr.mxu0 0.0
    %v2341 = vand.u32 %v2014, 4294901760
    %v2342 = vsub.f32 %v2014, %v2341
    %2343 = vmatpush1.msra.mxu0 %v2342
    %2344 = vmatprep.subr.mxu0 0.0
    %v2345 = vand.u32 %v2013, 4294901760
    %v2346 = vsub.f32 %v2013, %v2345
    %2347 = vmatpush1.msra.mxu0 %v2346
    %2348 = vmatprep.subr.mxu0 0.0
    %v2349 = vand.u32 %v2012, 4294901760
    %v2350 = vsub.f32 %v2012, %v2349
    %2351 = vmatpush1.msra.mxu0 %v2350
    %2352 = vmatprep.subr.mxu0 0.0
    %v2353 = vand.u32 %v2011, 4294901760
    %v2354 = vsub.f32 %v2011, %v2353
    %2355 = vmatpush1.msra.mxu0 %v2354
    %2356 = vmatprep.subr.mxu0 0.0
    %2357 = vmatpush2.msra.mxu0 0.0
    %2358 = vmatprep.subr.mxu0 0.0
    %2359 = vmatpush2.msra.mxu0 0.0
    %2360 = vmatprep.subr.mxu0 0.0
    %2361 = vmatpush2.msra.mxu0 0.0
    %2362 = vmatprep.subr.mxu0 0.0
    %2363 = vmatpush2.msra.mxu0 0.0
    %2364 = vmatprep.subr.mxu0 0.0
    %2365 = vmatpush2.msra.mxu0 0.0
    %2366 = vmatprep.subr.mxu0 0.0
    %2367 = vmatpush2.msra.mxu0 0.0
    %2368 = vmatprep.subr.mxu0 0.0
    %2369 = vmatpush2.msra.mxu0 0.0
    %2370 = vmatprep.subr.mxu0 0.0
    %2371 = vmatpush2.msra.mxu0 0.0
    %2372 = vmatprep.subr.mxu0 0.0
    %2373 = vmatpush2.msra.mxu0 0.0
    %2374 = vmatprep.subr.mxu0 0.0
    %2375 = vmatpush2.msra.mxu0 0.0
    %2376 = vmatprep.subr.mxu0 0.0
    %2377 = vmatpush2.msra.mxu0 0.0
    %2378 = vmatprep.subr.mxu0 0.0
    %2379 = vmatpush2.msra.mxu0 0.0
    %2380 = vmatprep.subr.mxu0 0.0
    %2381 = vmatpush2.msra.mxu0 0.0
    %2382 = vmatprep.subr.mxu0 0.0
    %2383 = vmatpush2.msra.mxu0 0.0
    %2384 = vmatprep.subr.mxu0 0.0
    %2385 = vmatpush2.msra.mxu0 0.0
    %2386 = vmatprep.subr.mxu0 0.0
    %2387 = vmatpush2.msra.mxu0 0.0
    %2388 = vmatprep.mubr.f32.mxu0 0.0
    %v2389 = vand.u32 %v2009, 4294901760
    %v2390 = vsub.f32 %v2009, %v2389
    %2391 = vmatmul.mubr.f32.gmra.mxu0 %v2390
    %v2392 = vpop.f32.mrf.mxu0
    %v2393 = vadd.f32 %v2283, %v2392
    %v2394 = vpop.f32.mrf.mxu0
    %2395 = vmatprep.mubr.f32.mxu0 0.0
    %v2396 = vand.u32 %v2010, 4294901760
    %v2397 = vsub.f32 %v2010, %v2396
    %2398 = vmatmul.mubr.f32.gmra.mxu0 %v2397
    %v2399 = vpop.f32.mrf.mxu0
    %v2400 = vadd.f32 %v2289, %v2399
    %v2401 = vpop.f32.mrf.mxu0
    %2402 = vdwg.mxu0
    %2403 = vmatprep.subr.mxu0 0.0
    %v2404 = vand.u32 %v2026, 4294901760
    %2405 = vmatpush1.msra.mxu0 %v2404
    %2406 = vmatprep.subr.mxu0 0.0
    %v2407 = vand.u32 %v2025, 4294901760
    %2408 = vmatpush1.msra.mxu0 %v2407
    %2409 = vmatprep.subr.mxu0 0.0
    %v2410 = vand.u32 %v2024, 4294901760
    %2411 = vmatpush1.msra.mxu0 %v2410
    %2412 = vmatprep.subr.mxu0 0.0
    %v2413 = vand.u32 %v2023, 4294901760
    %2414 = vmatpush1.msra.mxu0 %v2413
    %2415 = vmatprep.subr.mxu0 0.0
    %v2416 = vand.u32 %v2022, 4294901760
    %2417 = vmatpush1.msra.mxu0 %v2416
    %2418 = vmatprep.subr.mxu0 0.0
    %v2419 = vand.u32 %v2021, 4294901760
    %2420 = vmatpush1.msra.mxu0 %v2419
    %2421 = vmatprep.subr.mxu0 0.0
    %v2422 = vand.u32 %v2020, 4294901760
    %2423 = vmatpush1.msra.mxu0 %v2422
    %2424 = vmatprep.subr.mxu0 0.0
    %v2425 = vand.u32 %v2019, 4294901760
    %2426 = vmatpush1.msra.mxu0 %v2425
    %2427 = vmatprep.subr.mxu0 0.0
    %v2428 = vand.u32 %v2018, 4294901760
    %2429 = vmatpush1.msra.mxu0 %v2428
    %2430 = vmatprep.subr.mxu0 0.0
    %v2431 = vand.u32 %v2017, 4294901760
    %2432 = vmatpush1.msra.mxu0 %v2431
    %2433 = vmatprep.subr.mxu0 0.0
    %v2434 = vand.u32 %v2016, 4294901760
    %2435 = vmatpush1.msra.mxu0 %v2434
    %2436 = vmatprep.subr.mxu0 0.0
    %v2437 = vand.u32 %v2015, 4294901760
    %2438 = vmatpush1.msra.mxu0 %v2437
    %2439 = vmatprep.subr.mxu0 0.0
    %v2440 = vand.u32 %v2014, 4294901760
    %2441 = vmatpush1.msra.mxu0 %v2440
    %2442 = vmatprep.subr.mxu0 0.0
    %v2443 = vand.u32 %v2013, 4294901760
    %2444 = vmatpush1.msra.mxu0 %v2443
    %2445 = vmatprep.subr.mxu0 0.0
    %v2446 = vand.u32 %v2012, 4294901760
    %2447 = vmatpush1.msra.mxu0 %v2446
    %2448 = vmatprep.subr.mxu0 0.0
    %v2449 = vand.u32 %v2011, 4294901760
    %2450 = vmatpush1.msra.mxu0 %v2449
    %2451 = vmatprep.subr.mxu0 0.0
    %2452 = vmatpush2.msra.mxu0 0.0
    %2453 = vmatprep.subr.mxu0 0.0
    %2454 = vmatpush2.msra.mxu0 0.0
    %2455 = vmatprep.subr.mxu0 0.0
    %2456 = vmatpush2.msra.mxu0 0.0
    %2457 = vmatprep.subr.mxu0 0.0
    %2458 = vmatpush2.msra.mxu0 0.0
    %2459 = vmatprep.subr.mxu0 0.0
    %2460 = vmatpush2.msra.mxu0 0.0
    %2461 = vmatprep.subr.mxu0 0.0
    %2462 = vmatpush2.msra.mxu0 0.0
    %2463 = vmatprep.subr.mxu0 0.0
    %2464 = vmatpush2.msra.mxu0 0.0
    %2465 = vmatprep.subr.mxu0 0.0
    %2466 = vmatpush2.msra.mxu0 0.0
    %2467 = vmatprep.subr.mxu0 0.0
    %2468 = vmatpush2.msra.mxu0 0.0
    %2469 = vmatprep.subr.mxu0 0.0
    %2470 = vmatpush2.msra.mxu0 0.0
    %2471 = vmatprep.subr.mxu0 0.0
    %2472 = vmatpush2.msra.mxu0 0.0
    %2473 = vmatprep.subr.mxu0 0.0
    %2474 = vmatpush2.msra.mxu0 0.0
    %2475 = vmatprep.subr.mxu0 0.0
    %2476 = vmatpush2.msra.mxu0 0.0
    %2477 = vmatprep.subr.mxu0 0.0
    %2478 = vmatpush2.msra.mxu0 0.0
    %2479 = vmatprep.subr.mxu0 0.0
    %2480 = vmatpush2.msra.mxu0 0.0
    %2481 = vmatprep.subr.mxu0 0.0
    %2482 = vmatpush2.msra.mxu0 0.0
    %2483 = vmatprep.mubr.f32.mxu0 0.0
    %v2484 = vand.u32 %v2009, 4294901760
    %v2485 = vsub.f32 %v2009, %v2484
    %v2486 = vand.u32 %v2485, 4294901760
    %2487 = vmatmul.mubr.f32.gmra.mxu0 %v2486
    %v2488 = vpop.f32.mrf.mxu0
    %v2489 = vadd.f32 %v2393, %v2488
    %v2490 = vpop.f32.mrf.mxu0
    %2491 = vmatprep.mubr.f32.mxu0 0.0
    %v2492 = vand.u32 %v2010, 4294901760
    %v2493 = vsub.f32 %v2010, %v2492
    %v2494 = vand.u32 %v2493, 4294901760
    %2495 = vmatmul.mubr.f32.gmra.mxu0 %v2494
    %v2496 = vpop.f32.mrf.mxu0
    %v2497 = vadd.f32 %v2400, %v2496
    %v2498 = vpop.f32.mrf.mxu0
    %2499 = vdwg.mxu0
    %2500 = vmatprep.subr.mxu0 0.0
    %v2501 = vand.u32 %v2026, 4294901760
    %v2502 = vsub.f32 %v2026, %v2501
    %v2503 = vand.u32 %v2502, 4294901760
    %2504 = vmatpush1.msra.mxu0 %v2503
    %2505 = vmatprep.subr.mxu0 0.0
    %v2506 = vand.u32 %v2025, 4294901760
    %v2507 = vsub.f32 %v2025, %v2506
    %v2508 = vand.u32 %v2507, 4294901760
    %2509 = vmatpush1.msra.mxu0 %v2508
    %2510 = vmatprep.subr.mxu0 0.0
    %v2511 = vand.u32 %v2024, 4294901760
    %v2512 = vsub.f32 %v2024, %v2511
    %v2513 = vand.u32 %v2512, 4294901760
    %2514 = vmatpush1.msra.mxu0 %v2513
    %2515 = vmatprep.subr.mxu0 0.0
    %v2516 = vand.u32 %v2023, 4294901760
    %v2517 = vsub.f32 %v2023, %v2516
    %v2518 = vand.u32 %v2517, 4294901760
    %2519 = vmatpush1.msra.mxu0 %v2518
    %2520 = vmatprep.subr.mxu0 0.0
    %v2521 = vand.u32 %v2022, 4294901760
    %v2522 = vsub.f32 %v2022, %v2521
    %v2523 = vand.u32 %v2522, 4294901760
    %2524 = vmatpush1.msra.mxu0 %v2523
    %2525 = vmatprep.subr.mxu0 0.0
    %v2526 = vand.u32 %v2021, 4294901760
    %v2527 = vsub.f32 %v2021, %v2526
    %v2528 = vand.u32 %v2527, 4294901760
    %2529 = vmatpush1.msra.mxu0 %v2528
    %2530 = vmatprep.subr.mxu0 0.0
    %v2531 = vand.u32 %v2020, 4294901760
    %v2532 = vsub.f32 %v2020, %v2531
    %v2533 = vand.u32 %v2532, 4294901760
    %2534 = vmatpush1.msra.mxu0 %v2533
    %2535 = vmatprep.subr.mxu0 0.0
    %v2536 = vand.u32 %v2019, 4294901760
    %v2537 = vsub.f32 %v2019, %v2536
    %v2538 = vand.u32 %v2537, 4294901760
    %2539 = vmatpush1.msra.mxu0 %v2538
    %2540 = vmatprep.subr.mxu0 0.0
    %v2541 = vand.u32 %v2018, 4294901760
    %v2542 = vsub.f32 %v2018, %v2541
    %v2543 = vand.u32 %v2542, 4294901760
    %2544 = vmatpush1.msra.mxu0 %v2543
    %2545 = vmatprep.subr.mxu0 0.0
    %v2546 = vand.u32 %v2017, 4294901760
    %v2547 = vsub.f32 %v2017, %v2546
    %v2548 = vand.u32 %v2547, 4294901760
    %2549 = vmatpush1.msra.mxu0 %v2548
    %2550 = vmatprep.subr.mxu0 0.0
    %v2551 = vand.u32 %v2016, 4294901760
    %v2552 = vsub.f32 %v2016, %v2551
    %v2553 = vand.u32 %v2552, 4294901760
    %2554 = vmatpush1.msra.mxu0 %v2553
    %2555 = vmatprep.subr.mxu0 0.0
    %v2556 = vand.u32 %v2015, 4294901760
    %v2557 = vsub.f32 %v2015, %v2556
    %v2558 = vand.u32 %v2557, 4294901760
    %2559 = vmatpush1.msra.mxu0 %v2558
    %2560 = vmatprep.subr.mxu0 0.0
    %v2561 = vand.u32 %v2014, 4294901760
    %v2562 = vsub.f32 %v2014, %v2561
    %v2563 = vand.u32 %v2562, 4294901760
    %2564 = vmatpush1.msra.mxu0 %v2563
    %2565 = vmatprep.subr.mxu0 0.0
    %v2566 = vand.u32 %v2013, 4294901760
    %v2567 = vsub.f32 %v2013, %v2566
    %v2568 = vand.u32 %v2567, 4294901760
    %2569 = vmatpush1.msra.mxu0 %v2568
    %2570 = vmatprep.subr.mxu0 0.0
    %v2571 = vand.u32 %v2012, 4294901760
    %v2572 = vsub.f32 %v2012, %v2571
    %v2573 = vand.u32 %v2572, 4294901760
    %2574 = vmatpush1.msra.mxu0 %v2573
    %2575 = vmatprep.subr.mxu0 0.0
    %v2576 = vand.u32 %v2011, 4294901760
    %v2577 = vsub.f32 %v2011, %v2576
    %v2578 = vand.u32 %v2577, 4294901760
    %2579 = vmatpush1.msra.mxu0 %v2578
    %2580 = vmatprep.subr.mxu0 0.0
    %2581 = vmatpush2.msra.mxu0 0.0
    %2582 = vmatprep.subr.mxu0 0.0
    %2583 = vmatpush2.msra.mxu0 0.0
    %2584 = vmatprep.subr.mxu0 0.0
    %2585 = vmatpush2.msra.mxu0 0.0
    %2586 = vmatprep.subr.mxu0 0.0
    %2587 = vmatpush2.msra.mxu0 0.0
    %2588 = vmatprep.subr.mxu0 0.0
    %2589 = vmatpush2.msra.mxu0 0.0
    %2590 = vmatprep.subr.mxu0 0.0
    %2591 = vmatpush2.msra.mxu0 0.0
    %2592 = vmatprep.subr.mxu0 0.0
    %2593 = vmatpush2.msra.mxu0 0.0
    %2594 = vmatprep.subr.mxu0 0.0
    %2595 = vmatpush2.msra.mxu0 0.0
    %2596 = vmatprep.subr.mxu0 0.0
    %2597 = vmatpush2.msra.mxu0 0.0
    %2598 = vmatprep.subr.mxu0 0.0
    %2599 = vmatpush2.msra.mxu0 0.0
    %2600 = vmatprep.subr.mxu0 0.0
    %2601 = vmatpush2.msra.mxu0 0.0
    %2602 = vmatprep.subr.mxu0 0.0
    %2603 = vmatpush2.msra.mxu0 0.0
    %2604 = vmatprep.subr.mxu0 0.0
    %2605 = vmatpush2.msra.mxu0 0.0
    %2606 = vmatprep.subr.mxu0 0.0
    %2607 = vmatpush2.msra.mxu0 0.0
    %2608 = vmatprep.subr.mxu0 0.0
    %2609 = vmatpush2.msra.mxu0 0.0
    %2610 = vmatprep.subr.mxu0 0.0
    %2611 = vmatpush2.msra.mxu0 0.0
    %2612 = vmatprep.mubr.f32.mxu0 0.0
    %v2613 = vand.u32 %v2009, 4294901760
    %2614 = vmatmul.mubr.f32.gmra.mxu0 %v2613
    %v2615 = vpop.f32.mrf.mxu0
    %v2616 = vadd.f32 %v2489, %v2615
    %v2617 = vpop.f32.mrf.mxu0
    %2618 = vmatprep.mubr.f32.mxu0 0.0
    %v2619 = vand.u32 %v2010, 4294901760
    %2620 = vmatmul.mubr.f32.gmra.mxu0 %v2619
    %v2621 = vpop.f32.mrf.mxu0
    %v2622 = vadd.f32 %v2497, %v2621
    %v2623 = vpop.f32.mrf.mxu0
    %2624 = vdwg.mxu0
    %2625 = vmatprep.subr.mxu0 0.0
    %v2626 = vand.u32 %v2026, 4294901760
    %2627 = vmatpush1.msra.mxu0 %v2626
    %2628 = vmatprep.subr.mxu0 0.0
    %v2629 = vand.u32 %v2025, 4294901760
    %2630 = vmatpush1.msra.mxu0 %v2629
    %2631 = vmatprep.subr.mxu0 0.0
    %v2632 = vand.u32 %v2024, 4294901760
    %2633 = vmatpush1.msra.mxu0 %v2632
    %2634 = vmatprep.subr.mxu0 0.0
    %v2635 = vand.u32 %v2023, 4294901760
    %2636 = vmatpush1.msra.mxu0 %v2635
    %2637 = vmatprep.subr.mxu0 0.0
    %v2638 = vand.u32 %v2022, 4294901760
    %2639 = vmatpush1.msra.mxu0 %v2638
    %2640 = vmatprep.subr.mxu0 0.0
    %v2641 = vand.u32 %v2021, 4294901760
    %2642 = vmatpush1.msra.mxu0 %v2641
    %2643 = vmatprep.subr.mxu0 0.0
    %v2644 = vand.u32 %v2020, 4294901760
    %2645 = vmatpush1.msra.mxu0 %v2644
    %2646 = vmatprep.subr.mxu0 0.0
    %v2647 = vand.u32 %v2019, 4294901760
    %2648 = vmatpush1.msra.mxu0 %v2647
    %2649 = vmatprep.subr.mxu0 0.0
    %v2650 = vand.u32 %v2018, 4294901760
    %2651 = vmatpush1.msra.mxu0 %v2650
    %2652 = vmatprep.subr.mxu0 0.0
    %v2653 = vand.u32 %v2017, 4294901760
    %2654 = vmatpush1.msra.mxu0 %v2653
    %2655 = vmatprep.subr.mxu0 0.0
    %v2656 = vand.u32 %v2016, 4294901760
    %2657 = vmatpush1.msra.mxu0 %v2656
    %2658 = vmatprep.subr.mxu0 0.0
    %v2659 = vand.u32 %v2015, 4294901760
    %2660 = vmatpush1.msra.mxu0 %v2659
    %2661 = vmatprep.subr.mxu0 0.0
    %v2662 = vand.u32 %v2014, 4294901760
    %2663 = vmatpush1.msra.mxu0 %v2662
    %2664 = vmatprep.subr.mxu0 0.0
    %v2665 = vand.u32 %v2013, 4294901760
    %2666 = vmatpush1.msra.mxu0 %v2665
    %2667 = vmatprep.subr.mxu0 0.0
    %v2668 = vand.u32 %v2012, 4294901760
    %2669 = vmatpush1.msra.mxu0 %v2668
    %2670 = vmatprep.subr.mxu0 0.0
    %v2671 = vand.u32 %v2011, 4294901760
    %2672 = vmatpush1.msra.mxu0 %v2671
    %2673 = vmatprep.subr.mxu0 0.0
    %2674 = vmatpush2.msra.mxu0 0.0
    %2675 = vmatprep.subr.mxu0 0.0
    %2676 = vmatpush2.msra.mxu0 0.0
    %2677 = vmatprep.subr.mxu0 0.0
    %2678 = vmatpush2.msra.mxu0 0.0
    %2679 = vmatprep.subr.mxu0 0.0
    %2680 = vmatpush2.msra.mxu0 0.0
    %2681 = vmatprep.subr.mxu0 0.0
    %2682 = vmatpush2.msra.mxu0 0.0
    %2683 = vmatprep.subr.mxu0 0.0
    %2684 = vmatpush2.msra.mxu0 0.0
    %2685 = vmatprep.subr.mxu0 0.0
    %2686 = vmatpush2.msra.mxu0 0.0
    %2687 = vmatprep.subr.mxu0 0.0
    %2688 = vmatpush2.msra.mxu0 0.0
    %2689 = vmatprep.subr.mxu0 0.0
    %2690 = vmatpush2.msra.mxu0 0.0
    %2691 = vmatprep.subr.mxu0 0.0
    %2692 = vmatpush2.msra.mxu0 0.0
    %2693 = vmatprep.subr.mxu0 0.0
    %2694 = vmatpush2.msra.mxu0 0.0
    %2695 = vmatprep.subr.mxu0 0.0
    %2696 = vmatpush2.msra.mxu0 0.0
    %2697 = vmatprep.subr.mxu0 0.0
    %2698 = vmatpush2.msra.mxu0 0.0
    %2699 = vmatprep.subr.mxu0 0.0
    %2700 = vmatpush2.msra.mxu0 0.0
    %2701 = vmatprep.subr.mxu0 0.0
    %2702 = vmatpush2.msra.mxu0 0.0
    %2703 = vmatprep.subr.mxu0 0.0
    %2704 = vmatpush2.msra.mxu0 0.0
    %2705 = vmatprep.mubr.f32.mxu0 0.0
    %v2706 = vand.u32 %v2009, 4294901760
    %2707 = vmatmul.mubr.f32.gmra.mxu0 %v2706
    %v2708 = vpop.f32.mrf.mxu0
    %v2709 = vadd.f32 %v2616, %v2708
    %v2710 = vpop.f32.mrf.mxu0
    %2711 = vmatprep.mubr.f32.mxu0 0.0
    %v2712 = vand.u32 %v2010, 4294901760
    %2713 = vmatmul.mubr.f32.gmra.mxu0 %v2712
    %v2714 = vpop.f32.mrf.mxu0
    %v2715 = vadd.f32 %v2622, %v2714
    %v2716 = vpop.f32.mrf.mxu0
    %2717 = vdwg.mxu0
    %vm2718 = vcmp.gt.f32.partialorder %v2709, 0.0
    %vm2719 = vcmp.gt.f32.partialorder %v2715, 0.0
    %v2720 = vmul.f32 %v2709, 0.01
    %v2721 = vmul.f32 %v2715, 0.01
    %v2722 = vsel %vm2718, %v2709, %v2720
    %v2723 = vsel %vm2719, %v2715, %v2721
    %vm2724 = vcmask 80896
    %2725 = vst.msk [vmem:[#allocation5] sm:$0xff] %vm2724, %v2722
    %2726 = vst.msk [vmem:[#allocation5 + $0x8] sm:$0xff] %vm2724, %v2723
    // Predicated region
    $region30: #{tpu_custom_call.1} parent=1 // pred_check
      _
    $region31: #{tpu_custom_call.1} parent=1 // pred_check_branch
      %2728 = sbr.rel (0) target = $region33
    $region32: #{tpu_custom_call.1} parent=1 // pred_region
      %s2730 = ssub.s32 256, 256
      %2731 = vsyncadd [#allocation4], %s2730
      %s2732 = sshll.u32 [#allocation5], 4
      %s2733 = int_to_ptr.vmem [resolvable:$true] %s2732
      %2738 = dma.vmem_to_hbm [thread:$0]  %s2733, 256, %s6, [#allocation4], 128, 128, 8
    $region33: #{tpu_custom_call.1} parent=1 // pred_fallthru
      _
    // Predicated region
    $region34: #{tpu_custom_call.1} parent=1 // pred_check
      _
    $region35: #{tpu_custom_call.1} parent=1 // pred_check_branch
      %2740 = sbr.rel (0) target = $region37
    $region36: #{tpu_custom_call.1} parent=1 // pred_region
      %2741 = dma.done [#allocation4], 256
    $region37: #{tpu_custom_call.1} parent=1 // pred_fallthru
      _
    %2742 = vsyncpa [#allocation3], 1
    %2743 = vsyncpa [#allocation4], 1

</llo_original>
